<compile_context>
chip_gen: v7x
topology: tpu7x:2x2x1
jax: 0.10.0
libtpu: 0.0.40
codegen_flags: <defaults>
</compile_context>

<pallas_src>
import functools

import jax
import jax.numpy as jnp
from jax.experimental import pallas as pl
from jax.experimental.pallas import tpu as pltpu


# ---------------------------------------------------------------------------
# Tiling helpers (trace-time Python)
# ---------------------------------------------------------------------------
def _pick_tile(dim, cap, align):
    """Largest divisor of `dim` that is <= cap and a multiple of `align`;
    falls back to the full dim (full extent always satisfies the (8,128) rule)."""
    if dim <= cap:
        return dim
    start = cap - (cap % align)
    for t in range(start, 0, -align):
        if dim % t == 0:
            return t
    return dim


def _time_block(T, cap=16):
    """Largest divisor of T that is <= cap (timesteps per grid iteration)."""
    for t in range(min(T, cap), 0, -1):
        if T % t == 0:
            return t
    return T


# ---------------------------------------------------------------------------
# Tiled matmul + bias:  out = x @ w + b   (f32 accumulation, bf16-friendly w)
# Used for both the hoisted LSTM input projection and the decoder.
# ---------------------------------------------------------------------------
def _matmul_bias_kernel(x_ref, w_ref, b_ref, o_ref, acc_ref):
    @pl.when(pl.program_id(2) == 0)
    def _():
        acc_ref[...] = jnp.zeros_like(acc_ref)

    acc_ref[...] += jnp.dot(x_ref[...].astype(w_ref.dtype), w_ref[...],
                            preferred_element_type=jnp.float32)

    @pl.when(pl.program_id(2) == pl.num_programs(2) - 1)
    def _():
        o_ref[...] = (acc_ref[...] + b_ref[...]).astype(o_ref.dtype)


def matmul_bias(x, w, b, *, tm_cap=256, tn_cap=512, tk_cap=512):
    """x: (M, K) f32; w: (K, N) bf16/f32; b: (1, N) f32 -> (M, N) f32."""
    M, K = x.shape
    _, N = w.shape
    tm = _pick_tile(M, tm_cap, 8)      # sublane axis
    tn = _pick_tile(N, tn_cap, 128)    # lane axis (MXU-width multiples)
    tk = _pick_tile(K, tk_cap, 128)
    grid = (M // tm, N // tn, K // tk)
    return pl.pallas_call(
        _matmul_bias_kernel,
        out_shape=jax.ShapeDtypeStruct((M, N), jnp.float32),
        grid_spec=pltpu.PrefetchScalarGridSpec(
            num_scalar_prefetch=0,
            grid=grid,
            in_specs=[
                pl.BlockSpec((tm, tk), lambda i, j, k: (i, k)),
                pl.BlockSpec((tk, tn), lambda i, j, k: (k, j)),
                pl.BlockSpec((1, tn), lambda i, j, k: (0, j)),
            ],
            out_specs=pl.BlockSpec((tm, tn), lambda i, j, k: (i, j)),
            scratch_shapes=[pltpu.VMEM((tm, tn), jnp.float32)]),
        compiler_params=pltpu.CompilerParams(
            dimension_semantics=("parallel", "parallel", "arbitrary")),
    )(x, w, b)


# ---------------------------------------------------------------------------
# LSTM recurrence kernel.
#   gx      : precomputed  x_t @ Wih^T + (b_ih + b_hh)  for all t   (T, B, 4H)
#   per step: gates = gx_t + h_{t-1} @ Whh^T ; i,f,g,o split (PyTorch order)
#             c = f*c + i*g ; h = o*tanh(c)
# Grid = (T // T_BLK,) sequential time blocks; (h, c) live in VMEM scratch.
# ---------------------------------------------------------------------------
def lstm_rec_kernel(gx_ref, h0_ref, c0_ref, whh_ref, y_ref, cT_ref, h_sc, c_sc):
    blk = pl.program_id(0)

    @pl.when(blk == 0)
    def _():
        h_sc[...] = h0_ref[...]
        c_sc[...] = c0_ref[...]

    whh = whh_ref[...]                       # (H, 4H), resident
    nh = h_sc.shape[-1]
    t_blk = gx_ref.shape[0]                  # static block size

    # Static unrolled inner loop over the time block (bounded, small).
    for t in range(t_blk):
        h = h_sc[...]
        c = c_sc[...]
        gates = gx_ref[t] + jnp.dot(h, whh, preferred_element_type=jnp.float32)
        i_g = jax.nn.sigmoid(gates[:, 0 * nh:1 * nh])
        f_g = jax.nn.sigmoid(gates[:, 1 * nh:2 * nh])
        g_g = jnp.tanh(gates[:, 2 * nh:3 * nh])
        o_g = jax.nn.sigmoid(gates[:, 3 * nh:4 * nh])
        c_new = f_g * c + i_g * g_g
        h_new = o_g * jnp.tanh(c_new)
        h_sc[...] = h_new
        c_sc[...] = c_new
        y_ref[t] = h_new.astype(y_ref.dtype)

    # Output is resident across the (arbitrary) time axis; last write wins.
    cT_ref[...] = c_sc[...]


def lstm_layer(gx, h0, c0, whh_t):
    """gx: (T, B, 4H) f32; h0, c0: (B, H) f32; whh_t: (H, 4H) f32."""
    T, B, G = gx.shape
    H = h0.shape[-1]
    t_blk = _time_block(T, cap=16)
    y, cT = pl.pallas_call(
        lstm_rec_kernel,
        out_shape=(jax.ShapeDtypeStruct((T, B, H), jnp.float32),
                   jax.ShapeDtypeStruct((B, H), jnp.float32)),
        grid_spec=pltpu.PrefetchScalarGridSpec(
            num_scalar_prefetch=0,
            grid=(T // t_blk,),
            in_specs=[
                pl.BlockSpec((t_blk, B, G), lambda i: (i, 0, 0)),
                # Constant-index, resident inputs: single-buffered.
                pl.BlockSpec((B, H), lambda i: (0, 0),
                             pipeline_mode=pl.Buffered(1)),
                pl.BlockSpec((B, H), lambda i: (0, 0),
                             pipeline_mode=pl.Buffered(1)),
                pl.BlockSpec((H, G), lambda i: (0, 0),
                             pipeline_mode=pl.Buffered(1)),
            ],
            out_specs=(
                pl.BlockSpec((t_blk, B, H), lambda i: (i, 0, 0)),
                pl.BlockSpec((B, H), lambda i: (0, 0)),
            ),
            scratch_shapes=[pltpu.VMEM((B, H), jnp.float32),
                            pltpu.VMEM((B, H), jnp.float32)]),
        compiler_params=pltpu.CompilerParams(
            dimension_semantics=("arbitrary",)),   # recurrence: sequential
    )(gx, h0, c0, whh_t)
    return y, cT


# ---------------------------------------------------------------------------
# Parameter construction (deterministic, mirrors TorchLSTM.__init__)
# ---------------------------------------------------------------------------
def init_params(key, ntoken, ninp, nhid, nlayers):
    initrange = 0.1
    stdv = 1.0 / jnp.sqrt(jnp.float32(nhid))
    keys = jax.random.split(key, 2 + 4 * nlayers)

    enc_w = jax.random.uniform(keys[0], (ntoken, ninp), jnp.float32,
                               -initrange, initrange)
    dec_w = jax.random.uniform(keys[1], (ntoken, nhid), jnp.float32,
                               -initrange, initrange)
    dec_b = jnp.zeros((ntoken,), jnp.float32)

    layers = []
    for l in range(nlayers):
        d_in = ninp if l == 0 else nhid
        k = keys[2 + 4 * l: 2 + 4 * (l + 1)]
        w_ih = jax.random.uniform(k[0], (4 * nhid, d_in), jnp.float32, -stdv, stdv)
        w_hh = jax.random.uniform(k[1], (4 * nhid, nhid), jnp.float32, -stdv, stdv)
        b_ih = jax.random.uniform(k[2], (4 * nhid,), jnp.float32, -stdv, stdv)
        b_hh = jax.random.uniform(k[3], (4 * nhid,), jnp.float32, -stdv, stdv)
        layers.append(dict(
            wih_t=w_ih.T.astype(jnp.bfloat16),          # (d_in, 4H), MXU operand
            whh_t=w_hh.T,                               # (H, 4H), f32 (recurrence)
            b=(b_ih + b_hh).reshape(1, 4 * nhid),       # (1, 4H), f32
        ))
    return dict(enc_w=enc_w,
                dec_w_t=dec_w.T.astype(jnp.bfloat16),   # (H, V), MXU operand
                dec_b=dec_b.reshape(1, ntoken),
                layers=layers)


# ---------------------------------------------------------------------------
# Full forward: embedding (glue) -> [input-proj + recurrence] per layer -> decoder
# ---------------------------------------------------------------------------
@functools.partial(jax.jit)
def torch_lstm_forward(params, tokens, h0, c0):
    # tokens: (T, B) int32 ; h0, c0: (nlayers, B, H)
    T, B = tokens.shape
    emb = jnp.take(params["enc_w"], tokens, axis=0)    # (T, B, ninp) embedding gather
    # drop(emb): identity in eval mode.

    x = emb
    h_finals, c_finals = [], []
    for l, lp in enumerate(params["layers"]):
        D = x.shape[-1]
        G = lp["wih_t"].shape[-1]
        # Hoisted input projection for the whole sequence (one big MXU matmul).
        gx = matmul_bias(x.reshape(T * B, D), lp["wih_t"], lp["b"]).reshape(T, B, G)
        y, cT = lstm_layer(gx, h0[l], c0[l], lp["whh_t"])
        h_finals.append(y[-1])       # final hidden state of this layer
        c_finals.append(cT)
        x = y
        # inter-layer dropout: identity in eval mode.

    H = x.shape[-1]
    V = params["dec_w_t"].shape[-1]
    decoded = matmul_bias(x.reshape(T * B, H), params["dec_w_t"], params["dec_b"])
    decoded = decoded.reshape(T, B, V)
    return decoded, (jnp.stack(h_finals, 0), jnp.stack(c_finals, 0))


if __name__ == "__main__":
    ntoken, ninp, nhid, nlayers = 32, 16, 32, 2
    seq_len, batch = 8, 4

    key = jax.random.PRNGKey(0)
    pkey, tkey = jax.random.split(key)
    params = init_params(pkey, ntoken, ninp, nhid, nlayers)

    tokens = jax.random.randint(tkey, (seq_len, batch), 0, ntoken, dtype=jnp.int32)
    h0 = jnp.zeros((nlayers, batch, nhid), jnp.float32)   # init_hidden
    c0 = jnp.zeros((nlayers, batch, nhid), jnp.float32)

    decoded, (hN, cN) = torch_lstm_forward(params, tokens, h0, c0)
    jax.block_until_ready((decoded, hN, cN))

    assert decoded.shape == (seq_len, batch, ntoken)
    assert hN.shape == (nlayers, batch, nhid) and cN.shape == (nlayers, batch, nhid)
    assert bool(jnp.all(jnp.isfinite(decoded)))
    assert bool(jnp.all(jnp.isfinite(hN))) and bool(jnp.all(jnp.isfinite(cN)))
    print("KERNEL_OK")
</pallas_src>

<mosaic_0001>
module attributes {stable_mosaic.version = 11 : i64} {
  func.func @_matmul_bias_kernel(%arg0: i32, %arg1: i32, %arg2: i32, %arg3: memref<32x16xf32, #tpu.memory_space<vmem>>, %arg4: memref<16x128xbf16, #tpu.memory_space<vmem>>, %arg5: memref<1x128xf32, #tpu.memory_space<vmem>>, %arg6: memref<32x128xf32, #tpu.memory_space<vmem>>, %arg7: memref<32x128xf32, #tpu.memory_space<vmem>>) attributes {dimension_semantics = [#tpu.dimension_semantics<parallel>, #tpu.dimension_semantics<parallel>, #tpu.dimension_semantics<arbitrary>], iteration_bounds = array<i64: 1, 1, 1>, scalar_prefetch = 0 : i64, scratch_operands = 1 : i64, tpu.core_type = #tpu.core_type<tc>, window_params = [{transform_indices = @transform_0, window_bounds = array<i64: 32, 16>}, {transform_indices = @transform_1, window_bounds = array<i64: 16, 128>}, {transform_indices = @transform_2, window_bounds = array<i64: 1, 128>}, {transform_indices = @transform_3, window_bounds = array<i64: 32, 128>}]} {
    %c0_i32 = arith.constant 0 : i32
    %0 = arith.cmpi eq, %arg2, %c0_i32 : i32
    %1 = arith.extui %0 : i1 to i32
    %c0_i32_0 = arith.constant 0 : i32
    %2 = arith.cmpi ne, %1, %c0_i32_0 : i32
    scf.if %2 {
      %cst_10 = arith.constant 0.000000e+00 : f32
      %13 = vector.broadcast %cst_10 : f32 to vector<32x128xf32>
      %c0_11 = arith.constant 0 : index
      %c0_12 = arith.constant 0 : index
      %14 = vector.load %arg7[%c0_11, %c0_12] : memref<32x128xf32, #tpu.memory_space<vmem>>, vector<32x128xf32>
      tpu.vector_store %arg7[%c0_11, %c0_12], %13 {strides = array<i32>} : memref<32x128xf32, #tpu.memory_space<vmem>>, vector<32x128xf32>,
    } else {
    }
    %c0 = arith.constant 0 : index
    %c0_1 = arith.constant 0 : index
    %3 = vector.load %arg7[%c0, %c0_1] : memref<32x128xf32, #tpu.memory_space<vmem>>, vector<32x128xf32>
    %c0_2 = arith.constant 0 : index
    %c0_3 = arith.constant 0 : index
    %4 = vector.load %arg3[%c0_2, %c0_3] : memref<32x16xf32, #tpu.memory_space<vmem>>, vector<32x16xf32>
    %5 = arith.truncf %4 : vector<32x16xf32> to vector<32x16xbf16>
    %c0_4 = arith.constant 0 : index
    %c0_5 = arith.constant 0 : index
    %6 = vector.load %arg4[%c0_4, %c0_5] : memref<16x128xbf16, #tpu.memory_space<vmem>>, vector<16x128xbf16>
    %cst = arith.constant dense<0.000000e+00> : vector<32x128xf32>
    %7 = tpu.matmul %5, %6, %cst {dimension_numbers = #tpu.dot_dimension_numbers<[1], [0], [0], [1], [0, 0, 1, 1], [], []>} : vector<32x16xbf16>, vector<16x128xbf16>, vector<32x128xf32> -> vector<32x128xf32>
    %8 = arith.addf %3, %7 : vector<32x128xf32>
    %c0_6 = arith.constant 0 : index
    %c0_7 = arith.constant 0 : index
    %9 = vector.load %arg7[%c0_6, %c0_7] : memref<32x128xf32, #tpu.memory_space<vmem>>, vector<32x128xf32>
    tpu.vector_store %arg7[%c0_6, %c0_7], %8 {strides = array<i32>} : memref<32x128xf32, #tpu.memory_space<vmem>>, vector<32x128xf32>,
    %c0_i32_8 = arith.constant 0 : i32
    %10 = arith.cmpi eq, %arg2, %c0_i32_8 : i32
    %11 = arith.extui %10 : i1 to i32
    %c0_i32_9 = arith.constant 0 : i32
    %12 = arith.cmpi ne, %11, %c0_i32_9 : i32
    scf.if %12 {
      %c0_10 = arith.constant 0 : index
      %c0_11 = arith.constant 0 : index
      %13 = vector.load %arg7[%c0_10, %c0_11] : memref<32x128xf32, #tpu.memory_space<vmem>>, vector<32x128xf32>
      %c0_12 = arith.constant 0 : index
      %c0_13 = arith.constant 0 : index
      %14 = vector.load %arg5[%c0_12, %c0_13] : memref<1x128xf32, #tpu.memory_space<vmem>>, vector<1x128xf32>
      %15 = vector.broadcast %14 : vector<1x128xf32> to vector<32x128xf32>
      %16 = arith.addf %13, %15 : vector<32x128xf32>
      %c0_14 = arith.constant 0 : index
      %c0_15 = arith.constant 0 : index
      %17 = vector.load %arg6[%c0_14, %c0_15] : memref<32x128xf32, #tpu.memory_space<vmem>>, vector<32x128xf32>
      tpu.vector_store %arg6[%c0_14, %c0_15], %16 {strides = array<i32>} : memref<32x128xf32, #tpu.memory_space<vmem>>, vector<32x128xf32>,
    } else {
    }
    return
  }
  func.func @transform_0(%arg0: i32, %arg1: i32, %arg2: i32) -> (i32, i32) {
    %c0_i32 = arith.constant 0 : i32
    return %arg0, %arg2 : i32, i32
  }
  func.func @transform_1(%arg0: i32, %arg1: i32, %arg2: i32) -> (i32, i32) {
    %c0_i32 = arith.constant 0 : i32
    return %arg2, %arg1 : i32, i32
  }
  func.func @transform_2(%arg0: i32, %arg1: i32, %arg2: i32) -> (i32, i32) {
    %c0_i32 = arith.constant 0 : i32
    %c0_i32_0 = arith.constant 0 : i32
    return %c0_i32, %arg1 : i32, i32
  }
  func.func @transform_3(%arg0: i32, %arg1: i32, %arg2: i32) -> (i32, i32) {
    %c0_i32 = arith.constant 0 : i32
    return %arg0, %arg1 : i32, i32
  }
}

module attributes {stable_mosaic.version = 11 : i64} {
  func.func @lstm_rec_kernel(%arg0: i32, %arg1: memref<8x4x128xf32, #tpu.memory_space<vmem>>, %arg2: memref<4x32xf32, #tpu.memory_space<vmem>>, %arg3: memref<4x32xf32, #tpu.memory_space<vmem>>, %arg4: memref<32x128xf32, #tpu.memory_space<vmem>>, %arg5: memref<8x4x32xf32, #tpu.memory_space<vmem>>, %arg6: memref<4x32xf32, #tpu.memory_space<vmem>>, %arg7: memref<4x32xf32, #tpu.memory_space<vmem>>, %arg8: memref<4x32xf32, #tpu.memory_space<vmem>>) attributes {dimension_semantics = [#tpu.dimension_semantics<arbitrary>], iteration_bounds = array<i64: 1>, scalar_prefetch = 0 : i64, scratch_operands = 2 : i64, tpu.core_type = #tpu.core_type<tc>, window_params = [{transform_indices = @transform_0, window_bounds = array<i64: 8, 4, 128>}, {pipeline_mode = #tpu.pipeline_mode<synchronous>, transform_indices = @transform_1, window_bounds = array<i64: 4, 32>}, {pipeline_mode = #tpu.pipeline_mode<synchronous>, transform_indices = @transform_2, window_bounds = array<i64: 4, 32>}, {pipeline_mode = #tpu.pipeline_mode<synchronous>, transform_indices = @transform_3, window_bounds = array<i64: 32, 128>}, {transform_indices = @transform_4, window_bounds = array<i64: 8, 4, 32>}, {pipeline_mode = #tpu.pipeline_mode<synchronous>, transform_indices = @transform_5, window_bounds = array<i64: 4, 32>}]} {
    %c0_i32 = arith.constant 0 : i32
    %0 = arith.cmpi eq, %arg0, %c0_i32 : i32
    %1 = arith.extui %0 : i1 to i32
    %c0_i32_0 = arith.constant 0 : i32
    %2 = arith.cmpi ne, %1, %c0_i32_0 : i32
    scf.if %2 {
      %c0_142 = arith.constant 0 : index
      %c0_143 = arith.constant 0 : index
      %294 = vector.load %arg2[%c0_142, %c0_143] : memref<4x32xf32, #tpu.memory_space<vmem>>, vector<4x32xf32>
      %c0_144 = arith.constant 0 : index
      %c0_145 = arith.constant 0 : index
      %295 = vector.load %arg7[%c0_144, %c0_145] : memref<4x32xf32, #tpu.memory_space<vmem>>, vector<4x32xf32>
      tpu.vector_store %arg7[%c0_144, %c0_145], %294 {strides = array<i32>} : memref<4x32xf32, #tpu.memory_space<vmem>>, vector<4x32xf32>,
      %c0_146 = arith.constant 0 : index
      %c0_147 = arith.constant 0 : index
      %296 = vector.load %arg3[%c0_146, %c0_147] : memref<4x32xf32, #tpu.memory_space<vmem>>, vector<4x32xf32>
      %c0_148 = arith.constant 0 : index
      %c0_149 = arith.constant 0 : index
      %297 = vector.load %arg8[%c0_148, %c0_149] : memref<4x32xf32, #tpu.memory_space<vmem>>, vector<4x32xf32>
      tpu.vector_store %arg8[%c0_148, %c0_149], %296 {strides = array<i32>} : memref<4x32xf32, #tpu.memory_space<vmem>>, vector<4x32xf32>,
    } else {
    }
    %c0 = arith.constant 0 : index
    %c0_1 = arith.constant 0 : index
    %3 = vector.load %arg4[%c0, %c0_1] : memref<32x128xf32, #tpu.memory_space<vmem>>, vector<32x128xf32>
    %c0_2 = arith.constant 0 : index
    %c0_3 = arith.constant 0 : index
    %4 = vector.load %arg7[%c0_2, %c0_3] : memref<4x32xf32, #tpu.memory_space<vmem>>, vector<4x32xf32>
    %c0_4 = arith.constant 0 : index
    %c0_5 = arith.constant 0 : index
    %5 = vector.load %arg8[%c0_4, %c0_5] : memref<4x32xf32, #tpu.memory_space<vmem>>, vector<4x32xf32>
    %c0_6 = arith.constant 0 : index
    %c0_7 = arith.constant 0 : index
    %c0_8 = arith.constant 0 : index
    %6 = vector.load %arg1[%c0_6, %c0_7, %c0_8] : memref<8x4x128xf32, #tpu.memory_space<vmem>>, vector<1x4x128xf32>
    %7 = vector.shape_cast %6 : vector<1x4x128xf32> to vector<4x128xf32>
    %cst = arith.constant dense<0.000000e+00> : vector<4x128xf32>
    %8 = tpu.matmul %4, %3, %cst {dimension_numbers = #tpu.dot_dimension_numbers<[1], [0], [0], [1], [0, 0, 1, 1], [], []>} : vector<4x32xf32>, vector<32x128xf32>, vector<4x128xf32> -> vector<4x128xf32>
    %9 = arith.addf %7, %8 : vector<4x128xf32>
    %10 = vector.extract_strided_slice %9 {offsets = [0, 0], sizes = [4, 32], strides = [1, 1]} : vector<4x128xf32> to vector<4x32xf32>
    %11 = arith.negf %10 : vector<4x32xf32>
    %12 = math.exp %11 : vector<4x32xf32>
    %cst_9 = arith.constant 1.000000e+00 : f32
    %13 = vector.broadcast %cst_9 : f32 to vector<4x32xf32>
    %14 = arith.addf %13, %12 : vector<4x32xf32>
    %15 = arith.divf %13, %14 : vector<4x32xf32>
    %16 = vector.extract_strided_slice %9 {offsets = [0, 32], sizes = [4, 32], strides = [1, 1]} : vector<4x128xf32> to vector<4x32xf32>
    %17 = arith.negf %16 : vector<4x32xf32>
    %18 = math.exp %17 : vector<4x32xf32>
    %cst_10 = arith.constant 1.000000e+00 : f32
    %19 = vector.broadcast %cst_10 : f32 to vector<4x32xf32>
    %20 = arith.addf %19, %18 : vector<4x32xf32>
    %21 = arith.divf %19, %20 : vector<4x32xf32>
    %22 = vector.extract_strided_slice %9 {offsets = [0, 64], sizes = [4, 32], strides = [1, 1]} : vector<4x128xf32> to vector<4x32xf32>
    %23 = math.tanh %22 : vector<4x32xf32>
    %24 = vector.extract_strided_slice %9 {offsets = [0, 96], sizes = [4, 32], strides = [1, 1]} : vector<4x128xf32> to vector<4x32xf32>
    %25 = arith.negf %24 : vector<4x32xf32>
    %26 = math.exp %25 : vector<4x32xf32>
    %cst_11 = arith.constant 1.000000e+00 : f32
    %27 = vector.broadcast %cst_11 : f32 to vector<4x32xf32>
    %28 = arith.addf %27, %26 : vector<4x32xf32>
    %29 = arith.divf %27, %28 : vector<4x32xf32>
    %30 = arith.mulf %21, %5 : vector<4x32xf32>
    %31 = arith.mulf %15, %23 : vector<4x32xf32>
    %32 = arith.addf %30, %31 : vector<4x32xf32>
    %33 = math.tanh %32 : vector<4x32xf32>
    %34 = arith.mulf %29, %33 : vector<4x32xf32>
    %c0_12 = arith.constant 0 : index
    %c0_13 = arith.constant 0 : index
    %35 = vector.load %arg7[%c0_12, %c0_13] : memref<4x32xf32, #tpu.memory_space<vmem>>, vector<4x32xf32>
    tpu.vector_store %arg7[%c0_12, %c0_13], %34 {strides = array<i32>} : memref<4x32xf32, #tpu.memory_space<vmem>>, vector<4x32xf32>,
    %c0_14 = arith.constant 0 : index
    %c0_15 = arith.constant 0 : index
    %36 = vector.load %arg8[%c0_14, %c0_15] : memref<4x32xf32, #tpu.memory_space<vmem>>, vector<4x32xf32>
    tpu.vector_store %arg8[%c0_14, %c0_15], %32 {strides = array<i32>} : memref<4x32xf32, #tpu.memory_space<vmem>>, vector<4x32xf32>,
    %c0_16 = arith.constant 0 : index
    %c0_17 = arith.constant 0 : index
    %c0_18 = arith.constant 0 : index
    %37 = vector.load %arg5[%c0_16, %c0_17, %c0_18] : memref<8x4x32xf32, #tpu.memory_space<vmem>>, vector<1x4x32xf32>
    %38 = vector.shape_cast %37 : vector<1x4x32xf32> to vector<4x32xf32>
    %39 = vector.shape_cast %34 : vector<4x32xf32> to vector<1x4x32xf32>
    tpu.vector_store %arg5[%c0_16, %c0_17, %c0_18], %39 {strides = array<i32>} : memref<8x4x32xf32, #tpu.memory_space<vmem>>, vector<1x4x32xf32>,
    %c0_19 = arith.constant 0 : index
    %c0_20 = arith.constant 0 : index
    %40 = vector.load %arg7[%c0_19, %c0_20] : memref<4x32xf32, #tpu.memory_space<vmem>>, vector<4x32xf32>
    %c0_21 = arith.constant 0 : index
    %c0_22 = arith.constant 0 : index
    %41 = vector.load %arg8[%c0_21, %c0_22] : memref<4x32xf32, #tpu.memory_space<vmem>>, vector<4x32xf32>
    %c1 = arith.constant 1 : index
    %c0_23 = arith.constant 0 : index
    %c0_24 = arith.constant 0 : index
    %42 = vector.load %arg1[%c1, %c0_23, %c0_24] : memref<8x4x128xf32, #tpu.memory_space<vmem>>, vector<1x4x128xf32>
    %43 = vector.shape_cast %42 : vector<1x4x128xf32> to vector<4x128xf32>
    %cst_25 = arith.constant dense<0.000000e+00> : vector<4x128xf32>
    %44 = tpu.matmul %40, %3, %cst_25 {dimension_numbers = #tpu.dot_dimension_numbers<[1], [0], [0], [1], [0, 0, 1, 1], [], []>} : vector<4x32xf32>, vector<32x128xf32>, vector<4x128xf32> -> vector<4x128xf32>
    %45 = arith.addf %43, %44 : vector<4x128xf32>
    %46 = vector.extract_strided_slice %45 {offsets = [0, 0], sizes = [4, 32], strides = [1, 1]} : vector<4x128xf32> to vector<4x32xf32>
    %47 = arith.negf %46 : vector<4x32xf32>
    %48 = math.exp %47 : vector<4x32xf32>
    %cst_26 = arith.constant 1.000000e+00 : f32
    %49 = vector.broadcast %cst_26 : f32 to vector<4x32xf32>
    %50 = arith.addf %49, %48 : vector<4x32xf32>
    %51 = arith.divf %49, %50 : vector<4x32xf32>
    %52 = vector.extract_strided_slice %45 {offsets = [0, 32], sizes = [4, 32], strides = [1, 1]} : vector<4x128xf32> to vector<4x32xf32>
    %53 = arith.negf %52 : vector<4x32xf32>
    %54 = math.exp %53 : vector<4x32xf32>
    %cst_27 = arith.constant 1.000000e+00 : f32
    %55 = vector.broadcast %cst_27 : f32 to vector<4x32xf32>
    %56 = arith.addf %55, %54 : vector<4x32xf32>
    %57 = arith.divf %55, %56 : vector<4x32xf32>
    %58 = vector.extract_strided_slice %45 {offsets = [0, 64], sizes = [4, 32], strides = [1, 1]} : vector<4x128xf32> to vector<4x32xf32>
    %59 = math.tanh %58 : vector<4x32xf32>
    %60 = vector.extract_strided_slice %45 {offsets = [0, 96], sizes = [4, 32], strides = [1, 1]} : vector<4x128xf32> to vector<4x32xf32>
    %61 = arith.negf %60 : vector<4x32xf32>
    %62 = math.exp %61 : vector<4x32xf32>
    %cst_28 = arith.constant 1.000000e+00 : f32
    %63 = vector.broadcast %cst_28 : f32 to vector<4x32xf32>
    %64 = arith.addf %63, %62 : vector<4x32xf32>
    %65 = arith.divf %63, %64 : vector<4x32xf32>
    %66 = arith.mulf %57, %41 : vector<4x32xf32>
    %67 = arith.mulf %51, %59 : vector<4x32xf32>
    %68 = arith.addf %66, %67 : vector<4x32xf32>
    %69 = math.tanh %68 : vector<4x32xf32>
    %70 = arith.mulf %65, %69 : vector<4x32xf32>
    %c0_29 = arith.constant 0 : index
    %c0_30 = arith.constant 0 : index
    %71 = vector.load %arg7[%c0_29, %c0_30] : memref<4x32xf32, #tpu.memory_space<vmem>>, vector<4x32xf32>
    tpu.vector_store %arg7[%c0_29, %c0_30], %70 {strides = array<i32>} : memref<4x32xf32, #tpu.memory_space<vmem>>, vector<4x32xf32>,
    %c0_31 = arith.constant 0 : index
    %c0_32 = arith.constant 0 : index
    %72 = vector.load %arg8[%c0_31, %c0_32] : memref<4x32xf32, #tpu.memory_space<vmem>>, vector<4x32xf32>
    tpu.vector_store %arg8[%c0_31, %c0_32], %68 {strides = array<i32>} : memref<4x32xf32, #tpu.memory_space<vmem>>, vector<4x32xf32>,
    %c1_33 = arith.constant 1 : index
    %c0_34 = arith.constant 0 : index
    %c0_35 = arith.constant 0 : index
    %73 = vector.load %arg5[%c1_33, %c0_34, %c0_35] : memref<8x4x32xf32, #tpu.memory_space<vmem>>, vector<1x4x32xf32>
    %74 = vector.shape_cast %73 : vector<1x4x32xf32> to vector<4x32xf32>
    %75 = vector.shape_cast %70 : vector<4x32xf32> to vector<1x4x32xf32>
    tpu.vector_store %arg5[%c1_33, %c0_34, %c0_35], %75 {strides = array<i32>} : memref<8x4x32xf32, #tpu.memory_space<vmem>>, vector<1x4x32xf32>,
    %c0_36 = arith.constant 0 : index
    %c0_37 = arith.constant 0 : index
    %76 = vector.load %arg7[%c0_36, %c0_37] : memref<4x32xf32, #tpu.memory_space<vmem>>, vector<4x32xf32>
    %c0_38 = arith.constant 0 : index
    %c0_39 = arith.constant 0 : index
    %77 = vector.load %arg8[%c0_38, %c0_39] : memref<4x32xf32, #tpu.memory_space<vmem>>, vector<4x32xf32>
    %c2 = arith.constant 2 : index
    %c0_40 = arith.constant 0 : index
    %c0_41 = arith.constant 0 : index
    %78 = vector.load %arg1[%c2, %c0_40, %c0_41] : memref<8x4x128xf32, #tpu.memory_space<vmem>>, vector<1x4x128xf32>
    %79 = vector.shape_cast %78 : vector<1x4x128xf32> to vector<4x128xf32>
    %cst_42 = arith.constant dense<0.000000e+00> : vector<4x128xf32>
    %80 = tpu.matmul %76, %3, %cst_42 {dimension_numbers = #tpu.dot_dimension_numbers<[1], [0], [0], [1], [0, 0, 1, 1], [], []>} : vector<4x32xf32>, vector<32x128xf32>, vector<4x128xf32> -> vector<4x128xf32>
    %81 = arith.addf %79, %80 : vector<4x128xf32>
    %82 = vector.extract_strided_slice %81 {offsets = [0, 0], sizes = [4, 32], strides = [1, 1]} : vector<4x128xf32> to vector<4x32xf32>
    %83 = arith.negf %82 : vector<4x32xf32>
    %84 = math.exp %83 : vector<4x32xf32>
    %cst_43 = arith.constant 1.000000e+00 : f32
    %85 = vector.broadcast %cst_43 : f32 to vector<4x32xf32>
    %86 = arith.addf %85, %84 : vector<4x32xf32>
    %87 = arith.divf %85, %86 : vector<4x32xf32>
    %88 = vector.extract_strided_slice %81 {offsets = [0, 32], sizes = [4, 32], strides = [1, 1]} : vector<4x128xf32> to vector<4x32xf32>
    %89 = arith.negf %88 : vector<4x32xf32>
    %90 = math.exp %89 : vector<4x32xf32>
    %cst_44 = arith.constant 1.000000e+00 : f32
    %91 = vector.broadcast %cst_44 : f32 to vector<4x32xf32>
    %92 = arith.addf %91, %90 : vector<4x32xf32>
    %93 = arith.divf %91, %92 : vector<4x32xf32>
    %94 = vector.extract_strided_slice %81 {offsets = [0, 64], sizes = [4, 32], strides = [1, 1]} : vector<4x128xf32> to vector<4x32xf32>
    %95 = math.tanh %94 : vector<4x32xf32>
    %96 = vector.extract_strided_slice %81 {offsets = [0, 96], sizes = [4, 32], strides = [1, 1]} : vector<4x128xf32> to vector<4x32xf32>
    %97 = arith.negf %96 : vector<4x32xf32>
    %98 = math.exp %97 : vector<4x32xf32>
    %cst_45 = arith.constant 1.000000e+00 : f32
    %99 = vector.broadcast %cst_45 : f32 to vector<4x32xf32>
    %100 = arith.addf %99, %98 : vector<4x32xf32>
    %101 = arith.divf %99, %100 : vector<4x32xf32>
    %102 = arith.mulf %93, %77 : vector<4x32xf32>
    %103 = arith.mulf %87, %95 : vector<4x32xf32>
    %104 = arith.addf %102, %103 : vector<4x32xf32>
    %105 = math.tanh %104 : vector<4x32xf32>
    %106 = arith.mulf %101, %105 : vector<4x32xf32>
    %c0_46 = arith.constant 0 : index
    %c0_47 = arith.constant 0 : index
    %107 = vector.load %arg7[%c0_46, %c0_47] : memref<4x32xf32, #tpu.memory_space<vmem>>, vector<4x32xf32>
    tpu.vector_store %arg7[%c0_46, %c0_47], %106 {strides = array<i32>} : memref<4x32xf32, #tpu.memory_space<vmem>>, vector<4x32xf32>,
    %c0_48 = arith.constant 0 : index
    %c0_49 = arith.constant 0 : index
    %108 = vector.load %arg8[%c0_48, %c0_49] : memref<4x32xf32, #tpu.memory_space<vmem>>, vector<4x32xf32>
    tpu.vector_store %arg8[%c0_48, %c0_49], %104 {strides = array<i32>} : memref<4x32xf32, #tpu.memory_space<vmem>>, vector<4x32xf32>,
    %c2_50 = arith.constant 2 : index
    %c0_51 = arith.constant 0 : index
    %c0_52 = arith.constant 0 : index
    %109 = vector.load %arg5[%c2_50, %c0_51, %c0_52] : memref<8x4x32xf32, #tpu.memory_space<vmem>>, vector<1x4x32xf32>
    %110 = vector.shape_cast %109 : vector<1x4x32xf32> to vector<4x32xf32>
    %111 = vector.shape_cast %106 : vector<4x32xf32> to vector<1x4x32xf32>
    tpu.vector_store %arg5[%c2_50, %c0_51, %c0_52], %111 {strides = array<i32>} : memref<8x4x32xf32, #tpu.memory_space<vmem>>, vector<1x4x32xf32>,
    %c0_53 = arith.constant 0 : index
    %c0_54 = arith.constant 0 : index
    %112 = vector.load %arg7[%c0_53, %c0_54] : memref<4x32xf32, #tpu.memory_space<vmem>>, vector<4x32xf32>
    %c0_55 = arith.constant 0 : index
    %c0_56 = arith.constant 0 : index
    %113 = vector.load %arg8[%c0_55, %c0_56] : memref<4x32xf32, #tpu.memory_space<vmem>>, vector<4x32xf32>
    %c3 = arith.constant 3 : index
    %c0_57 = arith.constant 0 : index
    %c0_58 = arith.constant 0 : index
    %114 = vector.load %arg1[%c3, %c0_57, %c0_58] : memref<8x4x128xf32, #tpu.memory_space<vmem>>, vector<1x4x128xf32>
    %115 = vector.shape_cast %114 : vector<1x4x128xf32> to vector<4x128xf32>
    %cst_59 = arith.constant dense<0.000000e+00> : vector<4x128xf32>
    %116 = tpu.matmul %112, %3, %cst_59 {dimension_numbers = #tpu.dot_dimension_numbers<[1], [0], [0], [1], [0, 0, 1, 1], [], []>} : vector<4x32xf32>, vector<32x128xf32>, vector<4x128xf32> -> vector<4x128xf32>
    %117 = arith.addf %115, %116 : vector<4x128xf32>
    %118 = vector.extract_strided_slice %117 {offsets = [0, 0], sizes = [4, 32], strides = [1, 1]} : vector<4x128xf32> to vector<4x32xf32>
    %119 = arith.negf %118 : vector<4x32xf32>
    %120 = math.exp %119 : vector<4x32xf32>
    %cst_60 = arith.constant 1.000000e+00 : f32
    %121 = vector.broadcast %cst_60 : f32 to vector<4x32xf32>
    %122 = arith.addf %121, %120 : vector<4x32xf32>
    %123 = arith.divf %121, %122 : vector<4x32xf32>
    %124 = vector.extract_strided_slice %117 {offsets = [0, 32], sizes = [4, 32], strides = [1, 1]} : vector<4x128xf32> to vector<4x32xf32>
    %125 = arith.negf %124 : vector<4x32xf32>
    %126 = math.exp %125 : vector<4x32xf32>
    %cst_61 = arith.constant 1.000000e+00 : f32
    %127 = vector.broadcast %cst_61 : f32 to vector<4x32xf32>
    %128 = arith.addf %127, %126 : vector<4x32xf32>
    %129 = arith.divf %127, %128 : vector<4x32xf32>
    %130 = vector.extract_strided_slice %117 {offsets = [0, 64], sizes = [4, 32], strides = [1, 1]} : vector<4x128xf32> to vector<4x32xf32>
    %131 = math.tanh %130 : vector<4x32xf32>
    %132 = vector.extract_strided_slice %117 {offsets = [0, 96], sizes = [4, 32], strides = [1, 1]} : vector<4x128xf32> to vector<4x32xf32>
    %133 = arith.negf %132 : vector<4x32xf32>
    %134 = math.exp %133 : vector<4x32xf32>
    %cst_62 = arith.constant 1.000000e+00 : f32
    %135 = vector.broadcast %cst_62 : f32 to vector<4x32xf32>
    %136 = arith.addf %135, %134 : vector<4x32xf32>
    %137 = arith.divf %135, %136 : vector<4x32xf32>
    %138 = arith.mulf %129, %113 : vector<4x32xf32>
    %139 = arith.mulf %123, %131 : vector<4x32xf32>
    %140 = arith.addf %138, %139 : vector<4x32xf32>
    %141 = math.tanh %140 : vector<4x32xf32>
    %142 = arith.mulf %137, %141 : vector<4x32xf32>
    %c0_63 = arith.constant 0 : index
    %c0_64 = arith.constant 0 : index
    %143 = vector.load %arg7[%c0_63, %c0_64] : memref<4x32xf32, #tpu.memory_space<vmem>>, vector<4x32xf32>
    tpu.vector_store %arg7[%c0_63, %c0_64], %142 {strides = array<i32>} : memref<4x32xf32, #tpu.memory_space<vmem>>, vector<4x32xf32>,
    %c0_65 = arith.constant 0 : index
    %c0_66 = arith.constant 0 : index
    %144 = vector.load %arg8[%c0_65, %c0_66] : memref<4x32xf32, #tpu.memory_space<vmem>>, vector<4x32xf32>
    tpu.vector_store %arg8[%c0_65, %c0_66], %140 {strides = array<i32>} : memref<4x32xf32, #tpu.memory_space<vmem>>, vector<4x32xf32>,
    %c3_67 = arith.constant 3 : index
    %c0_68 = arith.constant 0 : index
    %c0_69 = arith.constant 0 : index
    %145 = vector.load %arg5[%c3_67, %c0_68, %c0_69] : memref<8x4x32xf32, #tpu.memory_space<vmem>>, vector<1x4x32xf32>
    %146 = vector.shape_cast %145 : vector<1x4x32xf32> to vector<4x32xf32>
    %147 = vector.shape_cast %142 : vector<4x32xf32> to vector<1x4x32xf32>
    tpu.vector_store %arg5[%c3_67, %c0_68, %c0_69], %147 {strides = array<i32>} : memref<8x4x32xf32, #tpu.memory_space<vmem>>, vector<1x4x32xf32>,
    %c0_70 = arith.constant 0 : index
    %c0_71 = arith.constant 0 : index
    %148 = vector.load %arg7[%c0_70, %c0_71] : memref<4x32xf32, #tpu.memory_space<vmem>>, vector<4x32xf32>
    %c0_72 = arith.constant 0 : index
    %c0_73 = arith.constant 0 : index
    %149 = vector.load %arg8[%c0_72, %c0_73] : memref<4x32xf32, #tpu.memory_space<vmem>>, vector<4x32xf32>
    %c4 = arith.constant 4 : index
    %c0_74 = arith.constant 0 : index
    %c0_75 = arith.constant 0 : index
    %150 = vector.load %arg1[%c4, %c0_74, %c0_75] : memref<8x4x128xf32, #tpu.memory_space<vmem>>, vector<1x4x128xf32>
    %151 = vector.shape_cast %150 : vector<1x4x128xf32> to vector<4x128xf32>
    %cst_76 = arith.constant dense<0.000000e+00> : vector<4x128xf32>
    %152 = tpu.matmul %148, %3, %cst_76 {dimension_numbers = #tpu.dot_dimension_numbers<[1], [0], [0], [1], [0, 0, 1, 1], [], []>} : vector<4x32xf32>, vector<32x128xf32>, vector<4x128xf32> -> vector<4x128xf32>
    %153 = arith.addf %151, %152 : vector<4x128xf32>
    %154 = vector.extract_strided_slice %153 {offsets = [0, 0], sizes = [4, 32], strides = [1, 1]} : vector<4x128xf32> to vector<4x32xf32>
    %155 = arith.negf %154 : vector<4x32xf32>
    %156 = math.exp %155 : vector<4x32xf32>
    %cst_77 = arith.constant 1.000000e+00 : f32
    %157 = vector.broadcast %cst_77 : f32 to vector<4x32xf32>
    %158 = arith.addf %157, %156 : vector<4x32xf32>
    %159 = arith.divf %157, %158 : vector<4x32xf32>
    %160 = vector.extract_strided_slice %153 {offsets = [0, 32], sizes = [4, 32], strides = [1, 1]} : vector<4x128xf32> to vector<4x32xf32>
    %161 = arith.negf %160 : vector<4x32xf32>
    %162 = math.exp %161 : vector<4x32xf32>
    %cst_78 = arith.constant 1.000000e+00 : f32
    %163 = vector.broadcast %cst_78 : f32 to vector<4x32xf32>
    %164 = arith.addf %163, %162 : vector<4x32xf32>
    %165 = arith.divf %163, %164 : vector<4x32xf32>
    %166 = vector.extract_strided_slice %153 {offsets = [0, 64], sizes = [4, 32], strides = [1, 1]} : vector<4x128xf32> to vector<4x32xf32>
    %167 = math.tanh %166 : vector<4x32xf32>
    %168 = vector.extract_strided_slice %153 {offsets = [0, 96], sizes = [4, 32], strides = [1, 1]} : vector<4x128xf32> to vector<4x32xf32>
    %169 = arith.negf %168 : vector<4x32xf32>
    %170 = math.exp %169 : vector<4x32xf32>
    %cst_79 = arith.constant 1.000000e+00 : f32
    %171 = vector.broadcast %cst_79 : f32 to vector<4x32xf32>
    %172 = arith.addf %171, %170 : vector<4x32xf32>
    %173 = arith.divf %171, %172 : vector<4x32xf32>
    %174 = arith.mulf %165, %149 : vector<4x32xf32>
    %175 = arith.mulf %159, %167 : vector<4x32xf32>
    %176 = arith.addf %174, %175 : vector<4x32xf32>
    %177 = math.tanh %176 : vector<4x32xf32>
    %178 = arith.mulf %173, %177 : vector<4x32xf32>
    %c0_80 = arith.constant 0 : index
    %c0_81 = arith.constant 0 : index
    %179 = vector.load %arg7[%c0_80, %c0_81] : memref<4x32xf32, #tpu.memory_space<vmem>>, vector<4x32xf32>
    tpu.vector_store %arg7[%c0_80, %c0_81], %178 {strides = array<i32>} : memref<4x32xf32, #tpu.memory_space<vmem>>, vector<4x32xf32>,
    %c0_82 = arith.constant 0 : index
    %c0_83 = arith.constant 0 : index
    %180 = vector.load %arg8[%c0_82, %c0_83] : memref<4x32xf32, #tpu.memory_space<vmem>>, vector<4x32xf32>
    tpu.vector_store %arg8[%c0_82, %c0_83], %176 {strides = array<i32>} : memref<4x32xf32, #tpu.memory_space<vmem>>, vector<4x32xf32>,
    %c4_84 = arith.constant 4 : index
    %c0_85 = arith.constant 0 : index
    %c0_86 = arith.constant 0 : index
    %181 = vector.load %arg5[%c4_84, %c0_85, %c0_86] : memref<8x4x32xf32, #tpu.memory_space<vmem>>, vector<1x4x32xf32>
    %182 = vector.shape_cast %181 : vector<1x4x32xf32> to vector<4x32xf32>
    %183 = vector.shape_cast %178 : vector<4x32xf32> to vector<1x4x32xf32>
    tpu.vector_store %arg5[%c4_84, %c0_85, %c0_86], %183 {strides = array<i32>} : memref<8x4x32xf32, #tpu.memory_space<vmem>>, vector<1x4x32xf32>,
    %c0_87 = arith.constant 0 : index
    %c0_88 = arith.constant 0 : index
    %184 = vector.load %arg7[%c0_87, %c0_88] : memref<4x32xf32, #tpu.memory_space<vmem>>, vector<4x32xf32>
    %c0_89 = arith.constant 0 : index
    %c0_90 = arith.constant 0 : index
    %185 = vector.load %arg8[%c0_89, %c0_90] : memref<4x32xf32, #tpu.memory_space<vmem>>, vector<4x32xf32>
    %c5 = arith.constant 5 : index
    %c0_91 = arith.constant 0 : index
    %c0_92 = arith.constant 0 : index
    %186 = vector.load %arg1[%c5, %c0_91, %c0_92] : memref<8x4x128xf32, #tpu.memory_space<vmem>>, vector<1x4x128xf32>
    %187 = vector.shape_cast %186 : vector<1x4x128xf32> to vector<4x128xf32>
    %cst_93 = arith.constant dense<0.000000e+00> : vector<4x128xf32>
    %188 = tpu.matmul %184, %3, %cst_93 {dimension_numbers = #tpu.dot_dimension_numbers<[1], [0], [0], [1], [0, 0, 1, 1], [], []>} : vector<4x32xf32>, vector<32x128xf32>, vector<4x128xf32> -> vector<4x128xf32>
    %189 = arith.addf %187, %188 : vector<4x128xf32>
    %190 = vector.extract_strided_slice %189 {offsets = [0, 0], sizes = [4, 32], strides = [1, 1]} : vector<4x128xf32> to vector<4x32xf32>
    %191 = arith.negf %190 : vector<4x32xf32>
    %192 = math.exp %191 : vector<4x32xf32>
    %cst_94 = arith.constant 1.000000e+00 : f32
    %193 = vector.broadcast %cst_94 : f32 to vector<4x32xf32>
    %194 = arith.addf %193, %192 : vector<4x32xf32>
    %195 = arith.divf %193, %194 : vector<4x32xf32>
    %196 = vector.extract_strided_slice %189 {offsets = [0, 32], sizes = [4, 32], strides = [1, 1]} : vector<4x128xf32> to vector<4x32xf32>
    %197 = arith.negf %196 : vector<4x32xf32>
    %198 = math.exp %197 : vector<4x32xf32>
    %cst_95 = arith.constant 1.000000e+00 : f32
    %199 = vector.broadcast %cst_95 : f32 to vector<4x32xf32>
    %200 = arith.addf %199, %198 : vector<4x32xf32>
    %201 = arith.divf %199, %200 : vector<4x32xf32>
    %202 = vector.extract_strided_slice %189 {offsets = [0, 64], sizes = [4, 32], strides = [1, 1]} : vector<4x128xf32> to vector<4x32xf32>
    %203 = math.tanh %202 : vector<4x32xf32>
    %204 = vector.extract_strided_slice %189 {offsets = [0, 96], sizes = [4, 32], strides = [1, 1]} : vector<4x128xf32> to vector<4x32xf32>
    %205 = arith.negf %204 : vector<4x32xf32>
    %206 = math.exp %205 : vector<4x32xf32>
    %cst_96 = arith.constant 1.000000e+00 : f32
    %207 = vector.broadcast %cst_96 : f32 to vector<4x32xf32>
    %208 = arith.addf %207, %206 : vector<4x32xf32>
    %209 = arith.divf %207, %208 : vector<4x32xf32>
    %210 = arith.mulf %201, %185 : vector<4x32xf32>
    %211 = arith.mulf %195, %203 : vector<4x32xf32>
    %212 = arith.addf %210, %211 : vector<4x32xf32>
    %213 = math.tanh %212 : vector<4x32xf32>
    %214 = arith.mulf %209, %213 : vector<4x32xf32>
    %c0_97 = arith.constant 0 : index
    %c0_98 = arith.constant 0 : index
    %215 = vector.load %arg7[%c0_97, %c0_98] : memref<4x32xf32, #tpu.memory_space<vmem>>, vector<4x32xf32>
    tpu.vector_store %arg7[%c0_97, %c0_98], %214 {strides = array<i32>} : memref<4x32xf32, #tpu.memory_space<vmem>>, vector<4x32xf32>,
    %c0_99 = arith.constant 0 : index
    %c0_100 = arith.constant 0 : index
    %216 = vector.load %arg8[%c0_99, %c0_100] : memref<4x32xf32, #tpu.memory_space<vmem>>, vector<4x32xf32>
    tpu.vector_store %arg8[%c0_99, %c0_100], %212 {strides = array<i32>} : memref<4x32xf32, #tpu.memory_space<vmem>>, vector<4x32xf32>,
    %c5_101 = arith.constant 5 : index
    %c0_102 = arith.constant 0 : index
    %c0_103 = arith.constant 0 : index
    %217 = vector.load %arg5[%c5_101, %c0_102, %c0_103] : memref<8x4x32xf32, #tpu.memory_space<vmem>>, vector<1x4x32xf32>
    %218 = vector.shape_cast %217 : vector<1x4x32xf32> to vector<4x32xf32>
    %219 = vector.shape_cast %214 : vector<4x32xf32> to vector<1x4x32xf32>
    tpu.vector_store %arg5[%c5_101, %c0_102, %c0_103], %219 {strides = array<i32>} : memref<8x4x32xf32, #tpu.memory_space<vmem>>, vector<1x4x32xf32>,
    %c0_104 = arith.constant 0 : index
    %c0_105 = arith.constant 0 : index
    %220 = vector.load %arg7[%c0_104, %c0_105] : memref<4x32xf32, #tpu.memory_space<vmem>>, vector<4x32xf32>
    %c0_106 = arith.constant 0 : index
    %c0_107 = arith.constant 0 : index
    %221 = vector.load %arg8[%c0_106, %c0_107] : memref<4x32xf32, #tpu.memory_space<vmem>>, vector<4x32xf32>
    %c6 = arith.constant 6 : index
    %c0_108 = arith.constant 0 : index
    %c0_109 = arith.constant 0 : index
    %222 = vector.load %arg1[%c6, %c0_108, %c0_109] : memref<8x4x128xf32, #tpu.memory_space<vmem>>, vector<1x4x128xf32>
    %223 = vector.shape_cast %222 : vector<1x4x128xf32> to vector<4x128xf32>
    %cst_110 = arith.constant dense<0.000000e+00> : vector<4x128xf32>
    %224 = tpu.matmul %220, %3, %cst_110 {dimension_numbers = #tpu.dot_dimension_numbers<[1], [0], [0], [1], [0, 0, 1, 1], [], []>} : vector<4x32xf32>, vector<32x128xf32>, vector<4x128xf32> -> vector<4x128xf32>
    %225 = arith.addf %223, %224 : vector<4x128xf32>
    %226 = vector.extract_strided_slice %225 {offsets = [0, 0], sizes = [4, 32], strides = [1, 1]} : vector<4x128xf32> to vector<4x32xf32>
    %227 = arith.negf %226 : vector<4x32xf32>
    %228 = math.exp %227 : vector<4x32xf32>
    %cst_111 = arith.constant 1.000000e+00 : f32
    %229 = vector.broadcast %cst_111 : f32 to vector<4x32xf32>
    %230 = arith.addf %229, %228 : vector<4x32xf32>
    %231 = arith.divf %229, %230 : vector<4x32xf32>
    %232 = vector.extract_strided_slice %225 {offsets = [0, 32], sizes = [4, 32], strides = [1, 1]} : vector<4x128xf32> to vector<4x32xf32>
    %233 = arith.negf %232 : vector<4x32xf32>
    %234 = math.exp %233 : vector<4x32xf32>
    %cst_112 = arith.constant 1.000000e+00 : f32
    %235 = vector.broadcast %cst_112 : f32 to vector<4x32xf32>
    %236 = arith.addf %235, %234 : vector<4x32xf32>
    %237 = arith.divf %235, %236 : vector<4x32xf32>
    %238 = vector.extract_strided_slice %225 {offsets = [0, 64], sizes = [4, 32], strides = [1, 1]} : vector<4x128xf32> to vector<4x32xf32>
    %239 = math.tanh %238 : vector<4x32xf32>
    %240 = vector.extract_strided_slice %225 {offsets = [0, 96], sizes = [4, 32], strides = [1, 1]} : vector<4x128xf32> to vector<4x32xf32>
    %241 = arith.negf %240 : vector<4x32xf32>
    %242 = math.exp %241 : vector<4x32xf32>
    %cst_113 = arith.constant 1.000000e+00 : f32
    %243 = vector.broadcast %cst_113 : f32 to vector<4x32xf32>
    %244 = arith.addf %243, %242 : vector<4x32xf32>
    %245 = arith.divf %243, %244 : vector<4x32xf32>
    %246 = arith.mulf %237, %221 : vector<4x32xf32>
    %247 = arith.mulf %231, %239 : vector<4x32xf32>
    %248 = arith.addf %246, %247 : vector<4x32xf32>
    %249 = math.tanh %248 : vector<4x32xf32>
    %250 = arith.mulf %245, %249 : vector<4x32xf32>
    %c0_114 = arith.constant 0 : index
    %c0_115 = arith.constant 0 : index
    %251 = vector.load %arg7[%c0_114, %c0_115] : memref<4x32xf32, #tpu.memory_space<vmem>>, vector<4x32xf32>
    tpu.vector_store %arg7[%c0_114, %c0_115], %250 {strides = array<i32>} : memref<4x32xf32, #tpu.memory_space<vmem>>, vector<4x32xf32>,
    %c0_116 = arith.constant 0 : index
    %c0_117 = arith.constant 0 : index
    %252 = vector.load %arg8[%c0_116, %c0_117] : memref<4x32xf32, #tpu.memory_space<vmem>>, vector<4x32xf32>
    tpu.vector_store %arg8[%c0_116, %c0_117], %248 {strides = array<i32>} : memref<4x32xf32, #tpu.memory_space<vmem>>, vector<4x32xf32>,
    %c6_118 = arith.constant 6 : index
    %c0_119 = arith.constant 0 : index
    %c0_120 = arith.constant 0 : index
    %253 = vector.load %arg5[%c6_118, %c0_119, %c0_120] : memref<8x4x32xf32, #tpu.memory_space<vmem>>, vector<1x4x32xf32>
    %254 = vector.shape_cast %253 : vector<1x4x32xf32> to vector<4x32xf32>
    %255 = vector.shape_cast %250 : vector<4x32xf32> to vector<1x4x32xf32>
    tpu.vector_store %arg5[%c6_118, %c0_119, %c0_120], %255 {strides = array<i32>} : memref<8x4x32xf32, #tpu.memory_space<vmem>>, vector<1x4x32xf32>,
    %c0_121 = arith.constant 0 : index
    %c0_122 = arith.constant 0 : index
    %256 = vector.load %arg7[%c0_121, %c0_122] : memref<4x32xf32, #tpu.memory_space<vmem>>, vector<4x32xf32>
    %c0_123 = arith.constant 0 : index
    %c0_124 = arith.constant 0 : index
    %257 = vector.load %arg8[%c0_123, %c0_124] : memref<4x32xf32, #tpu.memory_space<vmem>>, vector<4x32xf32>
    %c7 = arith.constant 7 : index
    %c0_125 = arith.constant 0 : index
    %c0_126 = arith.constant 0 : index
    %258 = vector.load %arg1[%c7, %c0_125, %c0_126] : memref<8x4x128xf32, #tpu.memory_space<vmem>>, vector<1x4x128xf32>
    %259 = vector.shape_cast %258 : vector<1x4x128xf32> to vector<4x128xf32>
    %cst_127 = arith.constant dense<0.000000e+00> : vector<4x128xf32>
    %260 = tpu.matmul %256, %3, %cst_127 {dimension_numbers = #tpu.dot_dimension_numbers<[1], [0], [0], [1], [0, 0, 1, 1], [], []>} : vector<4x32xf32>, vector<32x128xf32>, vector<4x128xf32> -> vector<4x128xf32>
    %261 = arith.addf %259, %260 : vector<4x128xf32>
    %262 = vector.extract_strided_slice %261 {offsets = [0, 0], sizes = [4, 32], strides = [1, 1]} : vector<4x128xf32> to vector<4x32xf32>
    %263 = arith.negf %262 : vector<4x32xf32>
    %264 = math.exp %263 : vector<4x32xf32>
    %cst_128 = arith.constant 1.000000e+00 : f32
    %265 = vector.broadcast %cst_128 : f32 to vector<4x32xf32>
    %266 = arith.addf %265, %264 : vector<4x32xf32>
    %267 = arith.divf %265, %266 : vector<4x32xf32>
    %268 = vector.extract_strided_slice %261 {offsets = [0, 32], sizes = [4, 32], strides = [1, 1]} : vector<4x128xf32> to vector<4x32xf32>
    %269 = arith.negf %268 : vector<4x32xf32>
    %270 = math.exp %269 : vector<4x32xf32>
    %cst_129 = arith.constant 1.000000e+00 : f32
    %271 = vector.broadcast %cst_129 : f32 to vector<4x32xf32>
    %272 = arith.addf %271, %270 : vector<4x32xf32>
    %273 = arith.divf %271, %272 : vector<4x32xf32>
    %274 = vector.extract_strided_slice %261 {offsets = [0, 64], sizes = [4, 32], strides = [1, 1]} : vector<4x128xf32> to vector<4x32xf32>
    %275 = math.tanh %274 : vector<4x32xf32>
    %276 = vector.extract_strided_slice %261 {offsets = [0, 96], sizes = [4, 32], strides = [1, 1]} : vector<4x128xf32> to vector<4x32xf32>
    %277 = arith.negf %276 : vector<4x32xf32>
    %278 = math.exp %277 : vector<4x32xf32>
    %cst_130 = arith.constant 1.000000e+00 : f32
    %279 = vector.broadcast %cst_130 : f32 to vector<4x32xf32>
    %280 = arith.addf %279, %278 : vector<4x32xf32>
    %281 = arith.divf %279, %280 : vector<4x32xf32>
    %282 = arith.mulf %273, %257 : vector<4x32xf32>
    %283 = arith.mulf %267, %275 : vector<4x32xf32>
    %284 = arith.addf %282, %283 : vector<4x32xf32>
    %285 = math.tanh %284 : vector<4x32xf32>
    %286 = arith.mulf %281, %285 : vector<4x32xf32>
    %c0_131 = arith.constant 0 : index
    %c0_132 = arith.constant 0 : index
    %287 = vector.load %arg7[%c0_131, %c0_132] : memref<4x32xf32, #tpu.memory_space<vmem>>, vector<4x32xf32>
    tpu.vector_store %arg7[%c0_131, %c0_132], %286 {strides = array<i32>} : memref<4x32xf32, #tpu.memory_space<vmem>>, vector<4x32xf32>,
    %c0_133 = arith.constant 0 : index
    %c0_134 = arith.constant 0 : index
    %288 = vector.load %arg8[%c0_133, %c0_134] : memref<4x32xf32, #tpu.memory_space<vmem>>, vector<4x32xf32>
    tpu.vector_store %arg8[%c0_133, %c0_134], %284 {strides = array<i32>} : memref<4x32xf32, #tpu.memory_space<vmem>>, vector<4x32xf32>,
    %c7_135 = arith.constant 7 : index
    %c0_136 = arith.constant 0 : index
    %c0_137 = arith.constant 0 : index
    %289 = vector.load %arg5[%c7_135, %c0_136, %c0_137] : memref<8x4x32xf32, #tpu.memory_space<vmem>>, vector<1x4x32xf32>
    %290 = vector.shape_cast %289 : vector<1x4x32xf32> to vector<4x32xf32>
    %291 = vector.shape_cast %286 : vector<4x32xf32> to vector<1x4x32xf32>
    tpu.vector_store %arg5[%c7_135, %c0_136, %c0_137], %291 {strides = array<i32>} : memref<8x4x32xf32, #tpu.memory_space<vmem>>, vector<1x4x32xf32>,
    %c0_138 = arith.constant 0 : index
    %c0_139 = arith.constant 0 : index
    %292 = vector.load %arg8[%c0_138, %c0_139] : memref<4x32xf32, #tpu.memory_space<vmem>>, vector<4x32xf32>
    %c0_140 = arith.constant 0 : index
    %c0_141 = arith.constant 0 : index
    %293 = vector.load %arg6[%c0_140, %c0_141] : memref<4x32xf32, #tpu.memory_space<vmem>>, vector<4x32xf32>
    tpu.vector_store %arg6[%c0_140, %c0_141], %292 {strides = array<i32>} : memref<4x32xf32, #tpu.memory_space<vmem>>, vector<4x32xf32>,
    return
  }
  func.func @transform_0(%arg0: i32) -> (i32, i32, i32) {
    %c0_i32 = arith.constant 0 : i32
    %c0_i32_0 = arith.constant 0 : i32
    %c0_i32_1 = arith.constant 0 : i32
    return %arg0, %c0_i32, %c0_i32_0 : i32, i32, i32
  }
  func.func @transform_1(%arg0: i32) -> (i32, i32) {
    %c0_i32 = arith.constant 0 : i32
    %c0_i32_0 = arith.constant 0 : i32
    %c0_i32_1 = arith.constant 0 : i32
    return %c0_i32, %c0_i32_0 : i32, i32
  }
  func.func @transform_2(%arg0: i32) -> (i32, i32) {
    %c0_i32 = arith.constant 0 : i32
    %c0_i32_0 = arith.constant 0 : i32
    %c0_i32_1 = arith.constant 0 : i32
    return %c0_i32, %c0_i32_0 : i32, i32
  }
  func.func @transform_3(%arg0: i32) -> (i32, i32) {
    %c0_i32 = arith.constant 0 : i32
    %c0_i32_0 = arith.constant 0 : i32
    %c0_i32_1 = arith.constant 0 : i32
    return %c0_i32, %c0_i32_0 : i32, i32
  }
  func.func @transform_4(%arg0: i32) -> (i32, i32, i32) {
    %c0_i32 = arith.constant 0 : i32
    %c0_i32_0 = arith.constant 0 : i32
    %c0_i32_1 = arith.constant 0 : i32
    return %arg0, %c0_i32, %c0_i32_0 : i32, i32, i32
  }
  func.func @transform_5(%arg0: i32) -> (i32, i32) {
    %c0_i32 = arith.constant 0 : i32
    %c0_i32_0 = arith.constant 0 : i32
    %c0_i32_1 = arith.constant 0 : i32
    return %c0_i32, %c0_i32_0 : i32, i32
  }
}

module attributes {stable_mosaic.version = 11 : i64} {
  func.func @_matmul_bias_kernel(%arg0: i32, %arg1: i32, %arg2: i32, %arg3: memref<32x32xf32, #tpu.memory_space<vmem>>, %arg4: memref<32x128xbf16, #tpu.memory_space<vmem>>, %arg5: memref<1x128xf32, #tpu.memory_space<vmem>>, %arg6: memref<32x128xf32, #tpu.memory_space<vmem>>, %arg7: memref<32x128xf32, #tpu.memory_space<vmem>>) attributes {dimension_semantics = [#tpu.dimension_semantics<parallel>, #tpu.dimension_semantics<parallel>, #tpu.dimension_semantics<arbitrary>], iteration_bounds = array<i64: 1, 1, 1>, scalar_prefetch = 0 : i64, scratch_operands = 1 : i64, tpu.core_type = #tpu.core_type<tc>, window_params = [{transform_indices = @transform_0, window_bounds = array<i64: 32, 32>}, {transform_indices = @transform_1, window_bounds = array<i64: 32, 128>}, {transform_indices = @transform_2, window_bounds = array<i64: 1, 128>}, {transform_indices = @transform_3, window_bounds = array<i64: 32, 128>}]} {
    %c0_i32 = arith.constant 0 : i32
    %0 = arith.cmpi eq, %arg2, %c0_i32 : i32
    %1 = arith.extui %0 : i1 to i32
    %c0_i32_0 = arith.constant 0 : i32
    %2 = arith.cmpi ne, %1, %c0_i32_0 : i32
    scf.if %2 {
      %cst_10 = arith.constant 0.000000e+00 : f32
      %13 = vector.broadcast %cst_10 : f32 to vector<32x128xf32>
      %c0_11 = arith.constant 0 : index
      %c0_12 = arith.constant 0 : index
      %14 = vector.load %arg7[%c0_11, %c0_12] : memref<32x128xf32, #tpu.memory_space<vmem>>, vector<32x128xf32>
      tpu.vector_store %arg7[%c0_11, %c0_12], %13 {strides = array<i32>} : memref<32x128xf32, #tpu.memory_space<vmem>>, vector<32x128xf32>,
    } else {
    }
    %c0 = arith.constant 0 : index
    %c0_1 = arith.constant 0 : index
    %3 = vector.load %arg7[%c0, %c0_1] : memref<32x128xf32, #tpu.memory_space<vmem>>, vector<32x128xf32>
    %c0_2 = arith.constant 0 : index
    %c0_3 = arith.constant 0 : index
    %4 = vector.load %arg3[%c0_2, %c0_3] : memref<32x32xf32, #tpu.memory_space<vmem>>, vector<32x32xf32>
    %5 = arith.truncf %4 : vector<32x32xf32> to vector<32x32xbf16>
    %c0_4 = arith.constant 0 : index
    %c0_5 = arith.constant 0 : index
    %6 = vector.load %arg4[%c0_4, %c0_5] : memref<32x128xbf16, #tpu.memory_space<vmem>>, vector<32x128xbf16>
    %cst = arith.constant dense<0.000000e+00> : vector<32x128xf32>
    %7 = tpu.matmul %5, %6, %cst {dimension_numbers = #tpu.dot_dimension_numbers<[1], [0], [0], [1], [0, 0, 1, 1], [], []>} : vector<32x32xbf16>, vector<32x128xbf16>, vector<32x128xf32> -> vector<32x128xf32>
    %8 = arith.addf %3, %7 : vector<32x128xf32>
    %c0_6 = arith.constant 0 : index
    %c0_7 = arith.constant 0 : index
    %9 = vector.load %arg7[%c0_6, %c0_7] : memref<32x128xf32, #tpu.memory_space<vmem>>, vector<32x128xf32>
    tpu.vector_store %arg7[%c0_6, %c0_7], %8 {strides = array<i32>} : memref<32x128xf32, #tpu.memory_space<vmem>>, vector<32x128xf32>,
    %c0_i32_8 = arith.constant 0 : i32
    %10 = arith.cmpi eq, %arg2, %c0_i32_8 : i32
    %11 = arith.extui %10 : i1 to i32
    %c0_i32_9 = arith.constant 0 : i32
    %12 = arith.cmpi ne, %11, %c0_i32_9 : i32
    scf.if %12 {
      %c0_10 = arith.constant 0 : index
      %c0_11 = arith.constant 0 : index
      %13 = vector.load %arg7[%c0_10, %c0_11] : memref<32x128xf32, #tpu.memory_space<vmem>>, vector<32x128xf32>
      %c0_12 = arith.constant 0 : index
      %c0_13 = arith.constant 0 : index
      %14 = vector.load %arg5[%c0_12, %c0_13] : memref<1x128xf32, #tpu.memory_space<vmem>>, vector<1x128xf32>
      %15 = vector.broadcast %14 : vector<1x128xf32> to vector<32x128xf32>
      %16 = arith.addf %13, %15 : vector<32x128xf32>
      %c0_14 = arith.constant 0 : index
      %c0_15 = arith.constant 0 : index
      %17 = vector.load %arg6[%c0_14, %c0_15] : memref<32x128xf32, #tpu.memory_space<vmem>>, vector<32x128xf32>
      tpu.vector_store %arg6[%c0_14, %c0_15], %16 {strides = array<i32>} : memref<32x128xf32, #tpu.memory_space<vmem>>, vector<32x128xf32>,
    } else {
    }
    return
  }
  func.func @transform_0(%arg0: i32, %arg1: i32, %arg2: i32) -> (i32, i32) {
    %c0_i32 = arith.constant 0 : i32
    return %arg0, %arg2 : i32, i32
  }
  func.func @transform_1(%arg0: i32, %arg1: i32, %arg2: i32) -> (i32, i32) {
    %c0_i32 = arith.constant 0 : i32
    return %arg2, %arg1 : i32, i32
  }
  func.func @transform_2(%arg0: i32, %arg1: i32, %arg2: i32) -> (i32, i32) {
    %c0_i32 = arith.constant 0 : i32
    %c0_i32_0 = arith.constant 0 : i32
    return %c0_i32, %arg1 : i32, i32
  }
  func.func @transform_3(%arg0: i32, %arg1: i32, %arg2: i32) -> (i32, i32) {
    %c0_i32 = arith.constant 0 : i32
    return %arg0, %arg1 : i32, i32
  }
}

module attributes {stable_mosaic.version = 11 : i64} {
  func.func @_matmul_bias_kernel(%arg0: i32, %arg1: i32, %arg2: i32, %arg3: memref<32x32xf32, #tpu.memory_space<vmem>>, %arg4: memref<32x32xbf16, #tpu.memory_space<vmem>>, %arg5: memref<1x32xf32, #tpu.memory_space<vmem>>, %arg6: memref<32x32xf32, #tpu.memory_space<vmem>>, %arg7: memref<32x32xf32, #tpu.memory_space<vmem>>) attributes {dimension_semantics = [#tpu.dimension_semantics<parallel>, #tpu.dimension_semantics<parallel>, #tpu.dimension_semantics<arbitrary>], iteration_bounds = array<i64: 1, 1, 1>, scalar_prefetch = 0 : i64, scratch_operands = 1 : i64, tpu.core_type = #tpu.core_type<tc>, window_params = [{transform_indices = @transform_0, window_bounds = array<i64: 32, 32>}, {transform_indices = @transform_1, window_bounds = array<i64: 32, 32>}, {transform_indices = @transform_2, window_bounds = array<i64: 1, 32>}, {transform_indices = @transform_3, window_bounds = array<i64: 32, 32>}]} {
    %c0_i32 = arith.constant 0 : i32
    %0 = arith.cmpi eq, %arg2, %c0_i32 : i32
    %1 = arith.extui %0 : i1 to i32
    %c0_i32_0 = arith.constant 0 : i32
    %2 = arith.cmpi ne, %1, %c0_i32_0 : i32
    scf.if %2 {
      %cst_10 = arith.constant 0.000000e+00 : f32
      %13 = vector.broadcast %cst_10 : f32 to vector<32x32xf32>
      %c0_11 = arith.constant 0 : index
      %c0_12 = arith.constant 0 : index
      %14 = vector.load %arg7[%c0_11, %c0_12] : memref<32x32xf32, #tpu.memory_space<vmem>>, vector<32x32xf32>
      tpu.vector_store %arg7[%c0_11, %c0_12], %13 {strides = array<i32>} : memref<32x32xf32, #tpu.memory_space<vmem>>, vector<32x32xf32>,
    } else {
    }
    %c0 = arith.constant 0 : index
    %c0_1 = arith.constant 0 : index
    %3 = vector.load %arg7[%c0, %c0_1] : memref<32x32xf32, #tpu.memory_space<vmem>>, vector<32x32xf32>
    %c0_2 = arith.constant 0 : index
    %c0_3 = arith.constant 0 : index
    %4 = vector.load %arg3[%c0_2, %c0_3] : memref<32x32xf32, #tpu.memory_space<vmem>>, vector<32x32xf32>
    %5 = arith.truncf %4 : vector<32x32xf32> to vector<32x32xbf16>
    %c0_4 = arith.constant 0 : index
    %c0_5 = arith.constant 0 : index
    %6 = vector.load %arg4[%c0_4, %c0_5] : memref<32x32xbf16, #tpu.memory_space<vmem>>, vector<32x32xbf16>
    %cst = arith.constant dense<0.000000e+00> : vector<32x32xf32>
    %7 = tpu.matmul %5, %6, %cst {dimension_numbers = #tpu.dot_dimension_numbers<[1], [0], [0], [1], [0, 0, 1, 1], [], []>} : vector<32x32xbf16>, vector<32x32xbf16>, vector<32x32xf32> -> vector<32x32xf32>
    %8 = arith.addf %3, %7 : vector<32x32xf32>
    %c0_6 = arith.constant 0 : index
    %c0_7 = arith.constant 0 : index
    %9 = vector.load %arg7[%c0_6, %c0_7] : memref<32x32xf32, #tpu.memory_space<vmem>>, vector<32x32xf32>
    tpu.vector_store %arg7[%c0_6, %c0_7], %8 {strides = array<i32>} : memref<32x32xf32, #tpu.memory_space<vmem>>, vector<32x32xf32>,
    %c0_i32_8 = arith.constant 0 : i32
    %10 = arith.cmpi eq, %arg2, %c0_i32_8 : i32
    %11 = arith.extui %10 : i1 to i32
    %c0_i32_9 = arith.constant 0 : i32
    %12 = arith.cmpi ne, %11, %c0_i32_9 : i32
    scf.if %12 {
      %c0_10 = arith.constant 0 : index
      %c0_11 = arith.constant 0 : index
      %13 = vector.load %arg7[%c0_10, %c0_11] : memref<32x32xf32, #tpu.memory_space<vmem>>, vector<32x32xf32>
      %c0_12 = arith.constant 0 : index
      %c0_13 = arith.constant 0 : index
      %14 = vector.load %arg5[%c0_12, %c0_13] : memref<1x32xf32, #tpu.memory_space<vmem>>, vector<1x32xf32>
      %15 = vector.broadcast %14 : vector<1x32xf32> to vector<32x32xf32>
      %16 = arith.addf %13, %15 : vector<32x32xf32>
      %c0_14 = arith.constant 0 : index
      %c0_15 = arith.constant 0 : index
      %17 = vector.load %arg6[%c0_14, %c0_15] : memref<32x32xf32, #tpu.memory_space<vmem>>, vector<32x32xf32>
      tpu.vector_store %arg6[%c0_14, %c0_15], %16 {strides = array<i32>} : memref<32x32xf32, #tpu.memory_space<vmem>>, vector<32x32xf32>,
    } else {
    }
    return
  }
  func.func @transform_0(%arg0: i32, %arg1: i32, %arg2: i32) -> (i32, i32) {
    %c0_i32 = arith.constant 0 : i32
    return %arg0, %arg2 : i32, i32
  }
  func.func @transform_1(%arg0: i32, %arg1: i32, %arg2: i32) -> (i32, i32) {
    %c0_i32 = arith.constant 0 : i32
    return %arg2, %arg1 : i32, i32
  }
  func.func @transform_2(%arg0: i32, %arg1: i32, %arg2: i32) -> (i32, i32) {
    %c0_i32 = arith.constant 0 : i32
    %c0_i32_0 = arith.constant 0 : i32
    return %c0_i32, %arg1 : i32, i32
  }
  func.func @transform_3(%arg0: i32, %arg1: i32, %arg2: i32) -> (i32, i32) {
    %c0_i32 = arith.constant 0 : i32
    return %arg0, %arg1 : i32, i32
  }
}

</mosaic_0001>

<llo_original>
// kernel: torch_lstm_forward.9
$region0: #{torch_lstm_forward.9}
  #allocation0 [shape = 'u32[]', space=smem, size = 0x4, offset = 0x4, fixed_abs, tag = 'smem constant byte address 0x4 - core index']
  #allocation1 [shape = 'u32[144,128]{1,0:T(1,128)}', space=vmem, size = 0x12000, scoped, tag = 'internal scratch']
  #allocation2 [shape = 'f32[32,32]{1,0:T(8,128)}', space=vmem, size = 0x4000, scoped, tag = 'scratch operand']
  %s0 = inlined_call_operand.vmem [shape: f32[32,32], index: 0, kind: input, shape index: {}]
  %s1 = inlined_call_operand.vmem [shape: bf16[32,32], index: 1, kind: input, shape index: {}]
  %s2 = inlined_call_operand.vmem [shape: f32[1,32], index: 2, kind: input, shape index: {}]
  %s3 = inlined_call_operand.hbm [shape: f32[32,32], index: 3, kind: output, shape index: {}]
  %s4 = sld [smem:[#allocation0]]
  $region30: #{torch_lstm_forward.9} parent=0
    _
  %s6 = ssub.s32 1, %s4
  %s7 = scalar_select 0, %s6, %s4
  $region1: #{torch_lstm_forward.9} parent=0
    #allocation3 [shape = 'u8[16384]{0}', space=vmem, size = 0x4000, scoped, tag = 'output window, operand 0, single buffered']
    #allocation4 [shape = 's32[1]{0}', space=sflag, size = 0x4, scoped, tag = 'scoped memory for torch_lstm_forward.9']
    %8 = vsyncpa [#allocation4], 0
    // Predicated region
    $region2: #{torch_lstm_forward.9} parent=1 // pred_check
      _
    $region3: #{torch_lstm_forward.9} parent=1 // pred_check_branch
      %10 = sbr.rel (0) target = $region5
    $region4: #{torch_lstm_forward.9} parent=1 // pred_region
      _
    $region5: #{torch_lstm_forward.9} parent=1 // pred_fallthru
      _
    // Predicated region
    $region6: #{torch_lstm_forward.9} parent=1 // pred_check
      _
    $region7: #{torch_lstm_forward.9} parent=1 // pred_check_branch
      %12 = sbr.rel (0) target = $region9
    $region8: #{torch_lstm_forward.9} parent=1 // pred_region
      _
    $region9: #{torch_lstm_forward.9} parent=1 // pred_fallthru
      _
    // Predicated region
    $region10: #{torch_lstm_forward.9} parent=1 // pred_check
      _
    $region11: #{torch_lstm_forward.9} parent=1 // pred_check_branch
      %14 = sbr.rel (0) target = $region13
    $region12: #{torch_lstm_forward.9} parent=1 // pred_region
      _
    $region13: #{torch_lstm_forward.9} parent=1 // pred_fallthru
      _
    %p16 = scmp.eq.s32.totalorder 0, 0
    // Predicated region
    $region14: #{torch_lstm_forward.9} parent=1 // pred_check
      %p17 = pneg %p16
    $region15: #{torch_lstm_forward.9} parent=1 // pred_check_branch
      %19 = sbr.rel (%p17) target = $region17
    $region16: #{torch_lstm_forward.9} parent=1 // pred_region
      %vm20 = vcmask 261120
      %21 = vst.msk [vmem:[#allocation2] sm:$0xff] %vm20, 0.0
      %22 = vst.msk [vmem:[#allocation2 + $0x8] sm:$0xff] %vm20, 0.0
      %23 = vst.msk [vmem:[#allocation2 + $0x10] sm:$0xff] %vm20, 0.0
      %24 = vst.msk [vmem:[#allocation2 + $0x18] sm:$0xff] %vm20, 0.0
    $region17: #{torch_lstm_forward.9} parent=1 // pred_fallthru
      _
    %v25 = vld [vmem:[#allocation2] sm:$0xff]
    %v26 = vld [vmem:[#allocation2 + $0x8] sm:$0xff]
    %v27 = vld [vmem:[#allocation2 + $0x10] sm:$0xff]
    %v28 = vld [vmem:[#allocation2 + $0x18] sm:$0xff]
    %v29 = vld [vmem:[%s0] sm:$0xff]
    %v30 = vld [vmem:[%s0 + $0x8] sm:$0xff]
    %v31 = vld [vmem:[%s0 + $0x10] sm:$0xff]
    %v32 = vld [vmem:[%s0 + $0x18] sm:$0xff]
    %v33 = vpack.c.bf16 %v30, %v29
    %v34 = vpack.c.bf16 %v32, %v31
    %v35 = vld [vmem:[%s1] sm:$0xf]
    %v36 = vld [vmem:[%s1 + $0x4] sm:$0xf]
    %v37 = vld [vmem:[%s1 + $0x8] sm:$0xf]
    %v38 = vld [vmem:[%s1 + $0xc] sm:$0xf]
    %v43 = vunpack.c.l.b16 %v35
    %v44 = vunpack.c.l.b16 %v36
    %v45 = vunpack.c.l.b16 %v37
    %v46 = vunpack.c.l.b16 %v38
    %v47 = vpack.c.b16 %v44, %v43
    %v48 = vpack.c.b16 %v46, %v45
    %vm51 = vcmask 261120
    %v53 = vsel %vm51, %v33, 0
    %v56 = vsel %vm51, %v34, 0
    %58 = vmatprep.subr.bf16.mxu0 0
    %59 = vmatpush1.bf16.msra.mxu0 %v47
    %60 = vmatprep.subr.bf16.mxu0 0
    %61 = vmatpush1.bf16.msra.mxu0 %v48
    %62 = vmatprep.subr.bf16.mxu0 0
    %63 = vmatpush1.bf16.msra.mxu0 0
    %64 = vmatprep.subr.bf16.mxu0 0
    %65 = vmatpush1.bf16.msra.mxu0 0
    %66 = vmatprep.subr.bf16.mxu0 0
    %67 = vmatpush1.bf16.msra.mxu0 0
    %68 = vmatprep.subr.bf16.mxu0 0
    %69 = vmatpush1.bf16.msra.mxu0 0
    %70 = vmatprep.subr.bf16.mxu0 0
    %71 = vmatpush1.bf16.msra.mxu0 0
    %72 = vmatprep.subr.bf16.mxu0 0
    %73 = vmatpush1.bf16.msra.mxu0 0
    %74 = vmatprep.subr.bf16.mxu0 0
    %75 = vmatpush1.bf16.msra.mxu0 0
    %76 = vmatprep.subr.bf16.mxu0 0
    %77 = vmatpush1.bf16.msra.mxu0 0
    %78 = vmatprep.subr.bf16.mxu0 0
    %79 = vmatpush1.bf16.msra.mxu0 0
    %80 = vmatprep.subr.bf16.mxu0 0
    %81 = vmatpush1.bf16.msra.mxu0 0
    %82 = vmatprep.subr.bf16.mxu0 0
    %83 = vmatpush1.bf16.msra.mxu0 0
    %84 = vmatprep.subr.bf16.mxu0 0
    %85 = vmatpush1.bf16.msra.mxu0 0
    %86 = vmatprep.subr.bf16.mxu0 0
    %87 = vmatpush1.bf16.msra.mxu0 0
    %88 = vmatprep.subr.bf16.mxu0 0
    %89 = vmatpush1.bf16.msra.mxu0 0
    %90 = vmatprep.mubr.bf16.mxu0 0
    %91 = vmatmul.mubr.bf16.gmra.mrb[0].mxu0 %v53
    %v92 = vpop.f32.mrb[0].mxu0
    %v93 = vadd.f32 0.0, %v92
    %v94 = vpop.f32.mrb[0].mxu0
    %v95 = vpop.f32.mrb[0].mxu0
    %v96 = vadd.f32 0.0, %v95
    %v97 = vpop.f32.mrb[0].mxu0
    %98 = vmatprep.mubr.bf16.mxu0 0
    %99 = vmatmul.mubr.bf16.gmra.mrb[0].mxu0 %v56
    %v100 = vpop.f32.mrb[0].mxu0
    %v101 = vadd.f32 0.0, %v100
    %v102 = vpop.f32.mrb[0].mxu0
    %v103 = vpop.f32.mrb[0].mxu0
    %v104 = vadd.f32 0.0, %v103
    %v105 = vpop.f32.mrb[0].mxu0
    %106 = vdwg.mxu0
    %v107 = vadd.f32 %v25, %v93
    %v108 = vadd.f32 %v26, %v96
    %v109 = vadd.f32 %v27, %v101
    %v110 = vadd.f32 %v28, %v104
    %111 = vst.msk [vmem:[#allocation2] sm:$0xff] %vm51, %v107
    %112 = vst.msk [vmem:[#allocation2 + $0x8] sm:$0xff] %vm51, %v108
    %113 = vst.msk [vmem:[#allocation2 + $0x10] sm:$0xff] %vm51, %v109
    %114 = vst.msk [vmem:[#allocation2 + $0x18] sm:$0xff] %vm51, %v110
    // Predicated region
    $region18: #{torch_lstm_forward.9} parent=1 // pred_check
      %p115 = pneg %p16
    $region19: #{torch_lstm_forward.9} parent=1 // pred_check_branch
      %117 = sbr.rel (%p115) target = $region21
    $region20: #{torch_lstm_forward.9} parent=1 // pred_region
      %v118 = vld [vmem:[#allocation2] sm:$0xff]
      %v119 = vld [vmem:[#allocation2 + $0x8] sm:$0xff]
      %v120 = vld [vmem:[#allocation2 + $0x10] sm:$0xff]
      %v121 = vld [vmem:[#allocation2 + $0x18] sm:$0xff]
      %v122 = vld [vmem:[%s2] sm:$0x1]
      %v124 = vlaneseq
      %v125 = vshrl.u32 %v124, 7
      %v126 = vsub.s32 0, %v125
      %v127 = vrot.slane %v122, %v126
      %v129 = vadd.f32 %v118, %v127
      %v130 = vadd.f32 %v119, %v127
      %v131 = vadd.f32 %v120, %v127
      %v132 = vadd.f32 %v121, %v127
      %133 = vst.msk [vmem:[#allocation3] sm:$0xff] %vm51, %v129
      %134 = vst.msk [vmem:[#allocation3 + $0x8] sm:$0xff] %vm51, %v130
      %135 = vst.msk [vmem:[#allocation3 + $0x10] sm:$0xff] %vm51, %v131
      %136 = vst.msk [vmem:[#allocation3 + $0x18] sm:$0xff] %vm51, %v132
    $region21: #{torch_lstm_forward.9} parent=1 // pred_fallthru
      _
    // Predicated region
    $region22: #{torch_lstm_forward.9} parent=1 // pred_check
      _
    $region23: #{torch_lstm_forward.9} parent=1 // pred_check_branch
      %138 = sbr.rel (0) target = $region25
    $region24: #{torch_lstm_forward.9} parent=1 // pred_region
      %s140 = ssub.s32 512, 512
      %141 = vsyncadd [#allocation4], %s140
      %s142 = sshll.u32 [#allocation3], 4
      %s143 = int_to_ptr.vmem [resolvable:$true] %s142
      %148 = dma.vmem_to_hbm [thread:$0]  %s143, 512, %s3, [#allocation4], 128, 128, 8
    $region25: #{torch_lstm_forward.9} parent=1 // pred_fallthru
      _
    // Predicated region
    $region26: #{torch_lstm_forward.9} parent=1 // pred_check
      _
    $region27: #{torch_lstm_forward.9} parent=1 // pred_check_branch
      %150 = sbr.rel (0) target = $region29
    $region28: #{torch_lstm_forward.9} parent=1 // pred_region
      %151 = dma.done [#allocation4], 512
    $region29: #{torch_lstm_forward.9} parent=1 // pred_fallthru
      _
    %152 = vsyncpa [#allocation4], 1

// kernel: torch_lstm_forward.5
$region0: #{torch_lstm_forward.5}
  #allocation0 [shape = 'u32[]', space=smem, size = 0x4, offset = 0x4, fixed_abs, tag = 'smem constant byte address 0x4 - core index']
  #allocation1 [shape = 'u32[144,128]{1,0:T(1,128)}', space=vmem, size = 0x12000, scoped, tag = 'internal scratch']
  #allocation2 [shape = 'f32[32,128]{1,0:T(8,128)}', space=vmem, size = 0x4000, scoped, tag = 'scratch operand']
  %s0 = inlined_call_operand.vmem [shape: f32[32,16], index: 0, kind: input, shape index: {}]
  %s1 = inlined_call_operand.vmem [shape: bf16[16,128], index: 1, kind: input, shape index: {}]
  %s2 = inlined_call_operand.vmem [shape: f32[1,128], index: 2, kind: input, shape index: {}]
  %s3 = inlined_call_operand.vmem [shape: f32[32,128], index: 3, kind: output, shape index: {}]
  %s4 = sld [smem:[#allocation0]]
  $region30: #{torch_lstm_forward.5} parent=0
    _
  %s6 = ssub.s32 1, %s4
  %s7 = scalar_select 0, %s6, %s4
  // Predicated region
  $region2: #{torch_lstm_forward.5} parent=0 // pred_check
    _
  $region3: #{torch_lstm_forward.5} parent=0 // pred_check_branch
    %9 = sbr.rel (0) target = $region5
  $region4: #{torch_lstm_forward.5} parent=0 // pred_region
    _
  $region5: #{torch_lstm_forward.5} parent=0 // pred_fallthru
    _
  // Predicated region
  $region6: #{torch_lstm_forward.5} parent=0 // pred_check
    _
  $region7: #{torch_lstm_forward.5} parent=0 // pred_check_branch
    %11 = sbr.rel (0) target = $region9
  $region8: #{torch_lstm_forward.5} parent=0 // pred_region
    _
  $region9: #{torch_lstm_forward.5} parent=0 // pred_fallthru
    _
  // Predicated region
  $region10: #{torch_lstm_forward.5} parent=0 // pred_check
    _
  $region11: #{torch_lstm_forward.5} parent=0 // pred_check_branch
    %13 = sbr.rel (0) target = $region13
  $region12: #{torch_lstm_forward.5} parent=0 // pred_region
    _
  $region13: #{torch_lstm_forward.5} parent=0 // pred_fallthru
    _
  %p15 = scmp.eq.s32.totalorder 0, 0
  // Predicated region
  $region14: #{torch_lstm_forward.5} parent=0 // pred_check
    %p16 = pneg %p15
  $region15: #{torch_lstm_forward.5} parent=0 // pred_check_branch
    %18 = sbr.rel (%p16) target = $region17
  $region16: #{torch_lstm_forward.5} parent=0 // pred_region
    %19 = vst [vmem:[#allocation2] sm:$0xff] 0.0
    %20 = vst [vmem:[#allocation2 + $0x8] sm:$0xff] 0.0
    %21 = vst [vmem:[#allocation2 + $0x10] sm:$0xff] 0.0
    %22 = vst [vmem:[#allocation2 + $0x18] sm:$0xff] 0.0
  $region17: #{torch_lstm_forward.5} parent=0 // pred_fallthru
    _
  %v23 = vld [vmem:[#allocation2] sm:$0xff]
  %v24 = vld [vmem:[#allocation2 + $0x8] sm:$0xff]
  %v25 = vld [vmem:[#allocation2 + $0x10] sm:$0xff]
  %v26 = vld [vmem:[#allocation2 + $0x18] sm:$0xff]
  %v27 = vld [vmem:[%s0] sm:$0xff]
  %v28 = vld [vmem:[%s0 + $0x8] sm:$0xff]
  %v29 = vld [vmem:[%s0 + $0x10] sm:$0xff]
  %v30 = vld [vmem:[%s0 + $0x18] sm:$0xff]
  %v31 = vpack.c.bf16 %v28, %v27
  %v32 = vpack.c.bf16 %v30, %v29
  %v33 = vld [vmem:[%s1] sm:$0xf]
  %v34 = vld [vmem:[%s1 + $0x4] sm:$0xf]
  %v37 = vunpack.c.l.b16 %v33
  %v38 = vunpack.c.l.b16 %v34
  %v39 = vpack.c.b16 %v38, %v37
  %vm41 = vcmask 130048
  %v43 = vsel %vm41, %v31, 0
  %v46 = vsel %vm41, %v32, 0
  %48 = vmatprep.subr.bf16.mxu0 0
  %49 = vmatpush1.bf16.msra.mxu0 %v39
  %50 = vmatprep.subr.bf16.mxu0 0
  %51 = vmatpush1.bf16.msra.mxu0 0
  %52 = vmatprep.subr.bf16.mxu0 0
  %53 = vmatpush1.bf16.msra.mxu0 0
  %54 = vmatprep.subr.bf16.mxu0 0
  %55 = vmatpush1.bf16.msra.mxu0 0
  %56 = vmatprep.subr.bf16.mxu0 0
  %57 = vmatpush1.bf16.msra.mxu0 0
  %58 = vmatprep.subr.bf16.mxu0 0
  %59 = vmatpush1.bf16.msra.mxu0 0
  %60 = vmatprep.subr.bf16.mxu0 0
  %61 = vmatpush1.bf16.msra.mxu0 0
  %62 = vmatprep.subr.bf16.mxu0 0
  %63 = vmatpush1.bf16.msra.mxu0 0
  %64 = vmatprep.subr.bf16.mxu0 0
  %65 = vmatpush1.bf16.msra.mxu0 0
  %66 = vmatprep.subr.bf16.mxu0 0
  %67 = vmatpush1.bf16.msra.mxu0 0
  %68 = vmatprep.subr.bf16.mxu0 0
  %69 = vmatpush1.bf16.msra.mxu0 0
  %70 = vmatprep.subr.bf16.mxu0 0
  %71 = vmatpush1.bf16.msra.mxu0 0
  %72 = vmatprep.subr.bf16.mxu0 0
  %73 = vmatpush1.bf16.msra.mxu0 0
  %74 = vmatprep.subr.bf16.mxu0 0
  %75 = vmatpush1.bf16.msra.mxu0 0
  %76 = vmatprep.subr.bf16.mxu0 0
  %77 = vmatpush1.bf16.msra.mxu0 0
  %78 = vmatprep.subr.bf16.mxu0 0
  %79 = vmatpush1.bf16.msra.mxu0 0
  %80 = vmatprep.mubr.bf16.mxu0 0
  %81 = vmatmul.mubr.bf16.gmra.mrb[0].mxu0 %v43
  %v82 = vpop.f32.mrb[0].mxu0
  %v83 = vadd.f32 0.0, %v82
  %v84 = vpop.f32.mrb[0].mxu0
  %v85 = vpop.f32.mrb[0].mxu0
  %v86 = vadd.f32 0.0, %v85
  %v87 = vpop.f32.mrb[0].mxu0
  %88 = vmatprep.mubr.bf16.mxu0 0
  %89 = vmatmul.mubr.bf16.gmra.mrb[0].mxu0 %v46
  %v90 = vpop.f32.mrb[0].mxu0
  %v91 = vadd.f32 0.0, %v90
  %v92 = vpop.f32.mrb[0].mxu0
  %v93 = vpop.f32.mrb[0].mxu0
  %v94 = vadd.f32 0.0, %v93
  %v95 = vpop.f32.mrb[0].mxu0
  %96 = vdwg.mxu0
  %v97 = vadd.f32 %v23, %v83
  %v98 = vadd.f32 %v24, %v86
  %v99 = vadd.f32 %v25, %v91
  %v100 = vadd.f32 %v26, %v94
  %101 = vst [vmem:[#allocation2] sm:$0xff] %v97
  %102 = vst [vmem:[#allocation2 + $0x8] sm:$0xff] %v98
  %103 = vst [vmem:[#allocation2 + $0x10] sm:$0xff] %v99
  %104 = vst [vmem:[#allocation2 + $0x18] sm:$0xff] %v100
  // Predicated region
  $region18: #{torch_lstm_forward.5} parent=0 // pred_check
    %p105 = pneg %p15
  $region19: #{torch_lstm_forward.5} parent=0 // pred_check_branch
    %107 = sbr.rel (%p105) target = $region21
  $region20: #{torch_lstm_forward.5} parent=0 // pred_region
    %v108 = vld [vmem:[#allocation2] sm:$0xff]
    %v109 = vld [vmem:[#allocation2 + $0x8] sm:$0xff]
    %v110 = vld [vmem:[#allocation2 + $0x10] sm:$0xff]
    %v111 = vld [vmem:[#allocation2 + $0x18] sm:$0xff]
    %v112 = vld [vmem:[%s2] sm:$0x1]
    %v114 = vlaneseq
    %v115 = vshrl.u32 %v114, 7
    %v116 = vsub.s32 0, %v115
    %v117 = vrot.slane %v112, %v116
    %v119 = vadd.f32 %v108, %v117
    %v120 = vadd.f32 %v109, %v117
    %v121 = vadd.f32 %v110, %v117
    %v122 = vadd.f32 %v111, %v117
    %123 = vst [vmem:[%s3] sm:$0xff] %v119
    %124 = vst [vmem:[%s3 + $0x8] sm:$0xff] %v120
    %125 = vst [vmem:[%s3 + $0x10] sm:$0xff] %v121
    %126 = vst [vmem:[%s3 + $0x18] sm:$0xff] %v122
  $region21: #{torch_lstm_forward.5} parent=0 // pred_fallthru
    _
  // Predicated region
  $region22: #{torch_lstm_forward.5} parent=0 // pred_check
    _
  $region23: #{torch_lstm_forward.5} parent=0 // pred_check_branch
    %128 = sbr.rel (0) target = $region25
  $region24: #{torch_lstm_forward.5} parent=0 // pred_region
    _
  $region25: #{torch_lstm_forward.5} parent=0 // pred_fallthru
    _
  // Predicated region
  $region26: #{torch_lstm_forward.5} parent=0 // pred_check
    _
  $region27: #{torch_lstm_forward.5} parent=0 // pred_check_branch
    %130 = sbr.rel (0) target = $region29
  $region28: #{torch_lstm_forward.5} parent=0 // pred_region
    _
  $region29: #{torch_lstm_forward.5} parent=0 // pred_fallthru
    _

// kernel: torch_lstm_forward.7
$region0: #{torch_lstm_forward.7}
  #allocation0 [shape = 'u32[]', space=smem, size = 0x4, offset = 0x4, fixed_abs, tag = 'smem constant byte address 0x4 - core index']
  #allocation1 [shape = 'u32[144,128]{1,0:T(1,128)}', space=vmem, size = 0x12000, scoped, tag = 'internal scratch']
  #allocation2 [shape = 'f32[32,128]{1,0:T(8,128)}', space=vmem, size = 0x4000, scoped, tag = 'scratch operand']
  %s0 = inlined_call_operand.vmem [shape: f32[32,32], index: 0, kind: input, shape index: {}]
  %s1 = inlined_call_operand.vmem [shape: bf16[32,128], index: 1, kind: input, shape index: {}]
  %s2 = inlined_call_operand.vmem [shape: f32[1,128], index: 2, kind: input, shape index: {}]
  %s3 = inlined_call_operand.vmem [shape: f32[32,128], index: 3, kind: output, shape index: {}]
  %s4 = sld [smem:[#allocation0]]
  $region30: #{torch_lstm_forward.7} parent=0
    _
  %s6 = ssub.s32 1, %s4
  %s7 = scalar_select 0, %s6, %s4
  // Predicated region
  $region2: #{torch_lstm_forward.7} parent=0 // pred_check
    _
  $region3: #{torch_lstm_forward.7} parent=0 // pred_check_branch
    %9 = sbr.rel (0) target = $region5
  $region4: #{torch_lstm_forward.7} parent=0 // pred_region
    _
  $region5: #{torch_lstm_forward.7} parent=0 // pred_fallthru
    _
  // Predicated region
  $region6: #{torch_lstm_forward.7} parent=0 // pred_check
    _
  $region7: #{torch_lstm_forward.7} parent=0 // pred_check_branch
    %11 = sbr.rel (0) target = $region9
  $region8: #{torch_lstm_forward.7} parent=0 // pred_region
    _
  $region9: #{torch_lstm_forward.7} parent=0 // pred_fallthru
    _
  // Predicated region
  $region10: #{torch_lstm_forward.7} parent=0 // pred_check
    _
  $region11: #{torch_lstm_forward.7} parent=0 // pred_check_branch
    %13 = sbr.rel (0) target = $region13
  $region12: #{torch_lstm_forward.7} parent=0 // pred_region
    _
  $region13: #{torch_lstm_forward.7} parent=0 // pred_fallthru
    _
  %p15 = scmp.eq.s32.totalorder 0, 0
  // Predicated region
  $region14: #{torch_lstm_forward.7} parent=0 // pred_check
    %p16 = pneg %p15
  $region15: #{torch_lstm_forward.7} parent=0 // pred_check_branch
    %18 = sbr.rel (%p16) target = $region17
  $region16: #{torch_lstm_forward.7} parent=0 // pred_region
    %19 = vst [vmem:[#allocation2] sm:$0xff] 0.0
    %20 = vst [vmem:[#allocation2 + $0x8] sm:$0xff] 0.0
    %21 = vst [vmem:[#allocation2 + $0x10] sm:$0xff] 0.0
    %22 = vst [vmem:[#allocation2 + $0x18] sm:$0xff] 0.0
  $region17: #{torch_lstm_forward.7} parent=0 // pred_fallthru
    _
  %v23 = vld [vmem:[#allocation2] sm:$0xff]
  %v24 = vld [vmem:[#allocation2 + $0x8] sm:$0xff]
  %v25 = vld [vmem:[#allocation2 + $0x10] sm:$0xff]
  %v26 = vld [vmem:[#allocation2 + $0x18] sm:$0xff]
  %v27 = vld [vmem:[%s0] sm:$0xff]
  %v28 = vld [vmem:[%s0 + $0x8] sm:$0xff]
  %v29 = vld [vmem:[%s0 + $0x10] sm:$0xff]
  %v30 = vld [vmem:[%s0 + $0x18] sm:$0xff]
  %v31 = vpack.c.bf16 %v28, %v27
  %v32 = vpack.c.bf16 %v30, %v29
  %v33 = vld [vmem:[%s1] sm:$0xf]
  %v34 = vld [vmem:[%s1 + $0x4] sm:$0xf]
  %v35 = vld [vmem:[%s1 + $0x8] sm:$0xf]
  %v36 = vld [vmem:[%s1 + $0xc] sm:$0xf]
  %v41 = vunpack.c.l.b16 %v33
  %v42 = vunpack.c.l.b16 %v34
  %v43 = vunpack.c.l.b16 %v35
  %v44 = vunpack.c.l.b16 %v36
  %v45 = vpack.c.b16 %v42, %v41
  %v46 = vpack.c.b16 %v44, %v43
  %vm49 = vcmask 261120
  %v51 = vsel %vm49, %v31, 0
  %v54 = vsel %vm49, %v32, 0
  %56 = vmatprep.subr.bf16.mxu0 0
  %57 = vmatpush1.bf16.msra.mxu0 %v45
  %58 = vmatprep.subr.bf16.mxu0 0
  %59 = vmatpush1.bf16.msra.mxu0 %v46
  %60 = vmatprep.subr.bf16.mxu0 0
  %61 = vmatpush1.bf16.msra.mxu0 0
  %62 = vmatprep.subr.bf16.mxu0 0
  %63 = vmatpush1.bf16.msra.mxu0 0
  %64 = vmatprep.subr.bf16.mxu0 0
  %65 = vmatpush1.bf16.msra.mxu0 0
  %66 = vmatprep.subr.bf16.mxu0 0
  %67 = vmatpush1.bf16.msra.mxu0 0
  %68 = vmatprep.subr.bf16.mxu0 0
  %69 = vmatpush1.bf16.msra.mxu0 0
  %70 = vmatprep.subr.bf16.mxu0 0
  %71 = vmatpush1.bf16.msra.mxu0 0
  %72 = vmatprep.subr.bf16.mxu0 0
  %73 = vmatpush1.bf16.msra.mxu0 0
  %74 = vmatprep.subr.bf16.mxu0 0
  %75 = vmatpush1.bf16.msra.mxu0 0
  %76 = vmatprep.subr.bf16.mxu0 0
  %77 = vmatpush1.bf16.msra.mxu0 0
  %78 = vmatprep.subr.bf16.mxu0 0
  %79 = vmatpush1.bf16.msra.mxu0 0
  %80 = vmatprep.subr.bf16.mxu0 0
  %81 = vmatpush1.bf16.msra.mxu0 0
  %82 = vmatprep.subr.bf16.mxu0 0
  %83 = vmatpush1.bf16.msra.mxu0 0
  %84 = vmatprep.subr.bf16.mxu0 0
  %85 = vmatpush1.bf16.msra.mxu0 0
  %86 = vmatprep.subr.bf16.mxu0 0
  %87 = vmatpush1.bf16.msra.mxu0 0
  %88 = vmatprep.mubr.bf16.mxu0 0
  %89 = vmatmul.mubr.bf16.gmra.mrb[0].mxu0 %v51
  %v90 = vpop.f32.mrb[0].mxu0
  %v91 = vadd.f32 0.0, %v90
  %v92 = vpop.f32.mrb[0].mxu0
  %v93 = vpop.f32.mrb[0].mxu0
  %v94 = vadd.f32 0.0, %v93
  %v95 = vpop.f32.mrb[0].mxu0
  %96 = vmatprep.mubr.bf16.mxu0 0
  %97 = vmatmul.mubr.bf16.gmra.mrb[0].mxu0 %v54
  %v98 = vpop.f32.mrb[0].mxu0
  %v99 = vadd.f32 0.0, %v98
  %v100 = vpop.f32.mrb[0].mxu0
  %v101 = vpop.f32.mrb[0].mxu0
  %v102 = vadd.f32 0.0, %v101
  %v103 = vpop.f32.mrb[0].mxu0
  %104 = vdwg.mxu0
  %v105 = vadd.f32 %v23, %v91
  %v106 = vadd.f32 %v24, %v94
  %v107 = vadd.f32 %v25, %v99
  %v108 = vadd.f32 %v26, %v102
  %109 = vst [vmem:[#allocation2] sm:$0xff] %v105
  %110 = vst [vmem:[#allocation2 + $0x8] sm:$0xff] %v106
  %111 = vst [vmem:[#allocation2 + $0x10] sm:$0xff] %v107
  %112 = vst [vmem:[#allocation2 + $0x18] sm:$0xff] %v108
  // Predicated region
  $region18: #{torch_lstm_forward.7} parent=0 // pred_check
    %p113 = pneg %p15
  $region19: #{torch_lstm_forward.7} parent=0 // pred_check_branch
    %115 = sbr.rel (%p113) target = $region21
  $region20: #{torch_lstm_forward.7} parent=0 // pred_region
    %v116 = vld [vmem:[#allocation2] sm:$0xff]
    %v117 = vld [vmem:[#allocation2 + $0x8] sm:$0xff]
    %v118 = vld [vmem:[#allocation2 + $0x10] sm:$0xff]
    %v119 = vld [vmem:[#allocation2 + $0x18] sm:$0xff]
    %v120 = vld [vmem:[%s2] sm:$0x1]
    %v122 = vlaneseq
    %v123 = vshrl.u32 %v122, 7
    %v124 = vsub.s32 0, %v123
    %v125 = vrot.slane %v120, %v124
    %v127 = vadd.f32 %v116, %v125
    %v128 = vadd.f32 %v117, %v125
    %v129 = vadd.f32 %v118, %v125
    %v130 = vadd.f32 %v119, %v125
    %131 = vst [vmem:[%s3] sm:$0xff] %v127
    %132 = vst [vmem:[%s3 + $0x8] sm:$0xff] %v128
    %133 = vst [vmem:[%s3 + $0x10] sm:$0xff] %v129
    %134 = vst [vmem:[%s3 + $0x18] sm:$0xff] %v130
  $region21: #{torch_lstm_forward.7} parent=0 // pred_fallthru
    _
  // Predicated region
  $region22: #{torch_lstm_forward.7} parent=0 // pred_check
    _
  $region23: #{torch_lstm_forward.7} parent=0 // pred_check_branch
    %136 = sbr.rel (0) target = $region25
  $region24: #{torch_lstm_forward.7} parent=0 // pred_region
    _
  $region25: #{torch_lstm_forward.7} parent=0 // pred_fallthru
    _
  // Predicated region
  $region26: #{torch_lstm_forward.7} parent=0 // pred_check
    _
  $region27: #{torch_lstm_forward.7} parent=0 // pred_check_branch
    %138 = sbr.rel (0) target = $region29
  $region28: #{torch_lstm_forward.7} parent=0 // pred_region
    _
  $region29: #{torch_lstm_forward.7} parent=0 // pred_fallthru
    _

// kernel: torch_lstm_forward.6
$region0: #{torch_lstm_forward.6}
  #allocation0 [shape = 'u32[]', space=smem, size = 0x4, offset = 0x4, fixed_abs, tag = 'smem constant byte address 0x4 - core index']
  #allocation1 [shape = 'u32[144,128]{1,0:T(1,128)}', space=vmem, size = 0x12000, scoped, tag = 'internal scratch']
  #allocation2 [shape = 'f32[4,32]{1,0:T(4,128)}', space=vmem, size = 0x800, scoped, tag = 'scratch operand']
  #allocation3 [shape = 'f32[4,32]{1,0:T(4,128)}', space=vmem, size = 0x800, scoped, tag = 'scratch operand']
  %s0 = inlined_call_operand.vmem [shape: f32[8,4,128], index: 0, kind: input, shape index: {}]
  %s1 = inlined_call_operand.vmem [shape: f32[4,32], index: 1, kind: input, shape index: {}]
  %s2 = inlined_call_operand.vmem [shape: f32[4,32], index: 2, kind: input, shape index: {}]
  %s3 = inlined_call_operand.vmem [shape: f32[32,128], index: 3, kind: input, shape index: {}]
  %s4 = inlined_call_operand.vmem [shape: f32[8,4,32], index: 4, kind: output, shape index: {0}]
  %s5 = inlined_call_operand.vmem [shape: f32[4,32], index: 5, kind: output, shape index: {1}]
  %6 = xla_tuple %s4, %s5
  %s7 = sld [smem:[#allocation0]]
  $region38: #{torch_lstm_forward.6} parent=0
    _
  %s9 = ssub.s32 1, %s7
  %s10 = scalar_select 0, %s9, %s7
  // Predicated region
  $region2: #{torch_lstm_forward.6} parent=0 // pred_check
    _
  $region3: #{torch_lstm_forward.6} parent=0 // pred_check_branch
    %12 = sbr.rel (0) target = $region5
  $region4: #{torch_lstm_forward.6} parent=0 // pred_region
    _
  $region5: #{torch_lstm_forward.6} parent=0 // pred_fallthru
    _
  // Predicated region
  $region6: #{torch_lstm_forward.6} parent=0 // pred_check
    _
  $region7: #{torch_lstm_forward.6} parent=0 // pred_check_branch
    %14 = sbr.rel (0) target = $region9
  $region8: #{torch_lstm_forward.6} parent=0 // pred_region
    _
  $region9: #{torch_lstm_forward.6} parent=0 // pred_fallthru
    _
  // Predicated region
  $region10: #{torch_lstm_forward.6} parent=0 // pred_check
    _
  $region11: #{torch_lstm_forward.6} parent=0 // pred_check_branch
    %16 = sbr.rel (0) target = $region13
  $region12: #{torch_lstm_forward.6} parent=0 // pred_region
    _
  $region13: #{torch_lstm_forward.6} parent=0 // pred_fallthru
    _
  // Predicated region
  $region14: #{torch_lstm_forward.6} parent=0 // pred_check
    _
  $region15: #{torch_lstm_forward.6} parent=0 // pred_check_branch
    %18 = sbr.rel (0) target = $region17
  $region16: #{torch_lstm_forward.6} parent=0 // pred_region
    _
  $region17: #{torch_lstm_forward.6} parent=0 // pred_fallthru
    _
  %p19 = scmp.eq.s32.totalorder 0, 0
  // Predicated region
  $region18: #{torch_lstm_forward.6} parent=0 // pred_check
    %p20 = pneg %p19
  $region19: #{torch_lstm_forward.6} parent=0 // pred_check_branch
    %22 = sbr.rel (%p20) target = $region21
  $region20: #{torch_lstm_forward.6} parent=0 // pred_region
    %v23 = vld [vmem:[%s1] sm:$0xf]
    %vm24 = vcmask 257024
    %25 = vst.msk [vmem:[#allocation2] sm:$0xf] %vm24, %v23
    %v26 = vld [vmem:[%s2] sm:$0xf]
    %27 = vst.msk [vmem:[#allocation3] sm:$0xf] %vm24, %v26
  $region21: #{torch_lstm_forward.6} parent=0 // pred_fallthru
    _
  %v28 = vld [vmem:[%s3] sm:$0xff]
  %v29 = vld [vmem:[%s3 + $0x8] sm:$0xff]
  %v30 = vld [vmem:[%s3 + $0x10] sm:$0xff]
  %v31 = vld [vmem:[%s3 + $0x18] sm:$0xff]
  %v32 = vld [vmem:[#allocation2] sm:$0xf]
  %v33 = vld [vmem:[#allocation3] sm:$0xf]
  %v34 = vld [vmem:[%s0] sm:$0xf]
  %vm35 = vcmask 261120
  %v37 = vsel %vm35, %v32, 0
  %39 = vmatprep.subr.mxu0 0.0
  %40 = vmatpush1.msra.mxu0 %v28
  %41 = vmatprep.subr.mxu0 0.0
  %42 = vmatpush1.msra.mxu0 %v29
  %43 = vmatprep.subr.mxu0 0.0
  %44 = vmatpush1.msra.mxu0 %v30
  %45 = vmatprep.subr.mxu0 0.0
  %46 = vmatpush1.msra.mxu0 %v31
  %47 = vmatprep.subr.mxu0 0.0
  %48 = vmatpush1.msra.mxu0 0.0
  %49 = vmatprep.subr.mxu0 0.0
  %50 = vmatpush1.msra.mxu0 0.0
  %51 = vmatprep.subr.mxu0 0.0
  %52 = vmatpush1.msra.mxu0 0.0
  %53 = vmatprep.subr.mxu0 0.0
  %54 = vmatpush1.msra.mxu0 0.0
  %55 = vmatprep.subr.mxu0 0.0
  %56 = vmatpush1.msra.mxu0 0.0
  %57 = vmatprep.subr.mxu0 0.0
  %58 = vmatpush1.msra.mxu0 0.0
  %59 = vmatprep.subr.mxu0 0.0
  %60 = vmatpush1.msra.mxu0 0.0
  %61 = vmatprep.subr.mxu0 0.0
  %62 = vmatpush1.msra.mxu0 0.0
  %63 = vmatprep.subr.mxu0 0.0
  %64 = vmatpush1.msra.mxu0 0.0
  %65 = vmatprep.subr.mxu0 0.0
  %66 = vmatpush1.msra.mxu0 0.0
  %67 = vmatprep.subr.mxu0 0.0
  %68 = vmatpush1.msra.mxu0 0.0
  %69 = vmatprep.subr.mxu0 0.0
  %70 = vmatpush1.msra.mxu0 0.0
  %71 = vmatprep.subr.mxu0 0.0
  %72 = vmatpush1.msra.mxu0 0.0
  %73 = vmatprep.subr.mxu0 0.0
  %74 = vmatpush1.msra.mxu0 0.0
  %75 = vmatprep.subr.mxu0 0.0
  %76 = vmatpush1.msra.mxu0 0.0
  %77 = vmatprep.subr.mxu0 0.0
  %78 = vmatpush1.msra.mxu0 0.0
  %79 = vmatprep.subr.mxu0 0.0
  %80 = vmatpush1.msra.mxu0 0.0
  %81 = vmatprep.subr.mxu0 0.0
  %82 = vmatpush1.msra.mxu0 0.0
  %83 = vmatprep.subr.mxu0 0.0
  %84 = vmatpush1.msra.mxu0 0.0
  %85 = vmatprep.subr.mxu0 0.0
  %86 = vmatpush1.msra.mxu0 0.0
  %87 = vmatprep.subr.mxu0 0.0
  %88 = vmatpush1.msra.mxu0 0.0
  %89 = vmatprep.subr.mxu0 0.0
  %90 = vmatpush1.msra.mxu0 0.0
  %91 = vmatprep.subr.mxu0 0.0
  %92 = vmatpush1.msra.mxu0 0.0
  %93 = vmatprep.subr.mxu0 0.0
  %94 = vmatpush1.msra.mxu0 0.0
  %95 = vmatprep.subr.mxu0 0.0
  %96 = vmatpush1.msra.mxu0 0.0
  %97 = vmatprep.subr.mxu0 0.0
  %98 = vmatpush1.msra.mxu0 0.0
  %99 = vmatprep.subr.mxu0 0.0
  %100 = vmatpush1.msra.mxu0 0.0
  %101 = vmatprep.subr.mxu0 0.0
  %102 = vmatpush1.msra.mxu0 0.0
  %103 = vmatprep.mubr.f32.mxu0 0.0
  %104 = vmatmul.mubr.f32.gmra.mrb[0].mxu0 %v37
  %v105 = vpop.f32.mrb[0].mxu0
  %v106 = vadd.f32 0.0, %v105
  %v107 = vpop.f32.mrb[0].mxu0
  %108 = vdwg.mxu0
  %v109 = vadd.f32 %v34, %v106
  %v110 = vxor.u32 %v109, 2147483648
  %v111 = vmul.f32 %v110, 1.442695
  %v112 = vpow.pop %v111
  %v113 = vadd.f32 %v112, 1.0
  %v114 = vrcp.pop %v113
  %v115 = vmul.f32 1.0, %v114
  %v116 = vtanh.pop %v109
  %118 = vrot.lane.b32.xlu0 %v33, 32
  %v119 = vpop.permute.xlu0 %118
  %v121 = vmul.f32 %v115, %v119
  %123 = vrot.lane.b32.xlu0 %v116, 64
  %v124 = vpop.permute.xlu0 %123
  %v126 = vmul.f32 %v115, %v124
  %128 = vrot.lane.b32.xlu0 %v126, 32
  %v129 = vpop.permute.xlu0 %128
  %v131 = vadd.f32 %v121, %v129
  %v132 = vtanh.pop %v131
  %134 = vrot.lane.b32.xlu0 %v132, 64
  %v135 = vpop.permute.xlu0 %134
  %v137 = vmul.f32 %v115, %v135
  %139 = vrot.lane.b32.xlu0 %v137, 32
  %v140 = vpop.permute.xlu0 %139
  %vm142 = vcmask 257024
  %143 = vst.msk [vmem:[#allocation2] sm:$0xf] %vm142, %v140
  %145 = vrot.lane.b32.xlu0 %v131, 96
  %v146 = vpop.permute.xlu0 %145
  %148 = vst.msk [vmem:[#allocation3] sm:$0xf] %vm142, %v146
  %149 = vst.msk [vmem:[%s4] sm:$0xf] %vm142, %v140
  %v150 = vld [vmem:[#allocation2] sm:$0xf]
  %v151 = vld [vmem:[#allocation3] sm:$0xf]
  %s152 = scalar_lea.vmem %s0, 4
  %v153 = vld [vmem:[%s152] sm:$0xf]
  %v155 = vsel %vm35, %v150, 0
  %157 = vmatprep.subr.mxu0 0.0
  %158 = vmatpush1.msra.mxu0 %v28
  %159 = vmatprep.subr.mxu0 0.0
  %160 = vmatpush1.msra.mxu0 %v29
  %161 = vmatprep.subr.mxu0 0.0
  %162 = vmatpush1.msra.mxu0 %v30
  %163 = vmatprep.subr.mxu0 0.0
  %164 = vmatpush1.msra.mxu0 %v31
  %165 = vmatprep.subr.mxu0 0.0
  %166 = vmatpush1.msra.mxu0 0.0
  %167 = vmatprep.subr.mxu0 0.0
  %168 = vmatpush1.msra.mxu0 0.0
  %169 = vmatprep.subr.mxu0 0.0
  %170 = vmatpush1.msra.mxu0 0.0
  %171 = vmatprep.subr.mxu0 0.0
  %172 = vmatpush1.msra.mxu0 0.0
  %173 = vmatprep.subr.mxu0 0.0
  %174 = vmatpush1.msra.mxu0 0.0
  %175 = vmatprep.subr.mxu0 0.0
  %176 = vmatpush1.msra.mxu0 0.0
  %177 = vmatprep.subr.mxu0 0.0
  %178 = vmatpush1.msra.mxu0 0.0
  %179 = vmatprep.subr.mxu0 0.0
  %180 = vmatpush1.msra.mxu0 0.0
  %181 = vmatprep.subr.mxu0 0.0
  %182 = vmatpush1.msra.mxu0 0.0
  %183 = vmatprep.subr.mxu0 0.0
  %184 = vmatpush1.msra.mxu0 0.0
  %185 = vmatprep.subr.mxu0 0.0
  %186 = vmatpush1.msra.mxu0 0.0
  %187 = vmatprep.subr.mxu0 0.0
  %188 = vmatpush1.msra.mxu0 0.0
  %189 = vmatprep.subr.mxu0 0.0
  %190 = vmatpush1.msra.mxu0 0.0
  %191 = vmatprep.subr.mxu0 0.0
  %192 = vmatpush1.msra.mxu0 0.0
  %193 = vmatprep.subr.mxu0 0.0
  %194 = vmatpush1.msra.mxu0 0.0
  %195 = vmatprep.subr.mxu0 0.0
  %196 = vmatpush1.msra.mxu0 0.0
  %197 = vmatprep.subr.mxu0 0.0
  %198 = vmatpush1.msra.mxu0 0.0
  %199 = vmatprep.subr.mxu0 0.0
  %200 = vmatpush1.msra.mxu0 0.0
  %201 = vmatprep.subr.mxu0 0.0
  %202 = vmatpush1.msra.mxu0 0.0
  %203 = vmatprep.subr.mxu0 0.0
  %204 = vmatpush1.msra.mxu0 0.0
  %205 = vmatprep.subr.mxu0 0.0
  %206 = vmatpush1.msra.mxu0 0.0
  %207 = vmatprep.subr.mxu0 0.0
  %208 = vmatpush1.msra.mxu0 0.0
  %209 = vmatprep.subr.mxu0 0.0
  %210 = vmatpush1.msra.mxu0 0.0
  %211 = vmatprep.subr.mxu0 0.0
  %212 = vmatpush1.msra.mxu0 0.0
  %213 = vmatprep.subr.mxu0 0.0
  %214 = vmatpush1.msra.mxu0 0.0
  %215 = vmatprep.subr.mxu0 0.0
  %216 = vmatpush1.msra.mxu0 0.0
  %217 = vmatprep.subr.mxu0 0.0
  %218 = vmatpush1.msra.mxu0 0.0
  %219 = vmatprep.subr.mxu0 0.0
  %220 = vmatpush1.msra.mxu0 0.0
  %221 = vmatprep.mubr.f32.mxu0 0.0
  %222 = vmatmul.mubr.f32.gmra.mrb[0].mxu0 %v155
  %v223 = vpop.f32.mrb[0].mxu0
  %v224 = vadd.f32 0.0, %v223
  %v225 = vpop.f32.mrb[0].mxu0
  %226 = vdwg.mxu0
  %v227 = vadd.f32 %v153, %v224
  %v228 = vxor.u32 %v227, 2147483648
  %v229 = vmul.f32 %v228, 1.442695
  %v230 = vpow.pop %v229
  %v231 = vadd.f32 %v230, 1.0
  %v232 = vrcp.pop %v231
  %v233 = vmul.f32 1.0, %v232
  %v234 = vtanh.pop %v227
  %236 = vrot.lane.b32.xlu0 %v151, 32
  %v237 = vpop.permute.xlu0 %236
  %v239 = vmul.f32 %v233, %v237
  %241 = vrot.lane.b32.xlu0 %v234, 64
  %v242 = vpop.permute.xlu0 %241
  %v244 = vmul.f32 %v233, %v242
  %246 = vrot.lane.b32.xlu0 %v244, 32
  %v247 = vpop.permute.xlu0 %246
  %v249 = vadd.f32 %v239, %v247
  %v250 = vtanh.pop %v249
  %252 = vrot.lane.b32.xlu0 %v250, 64
  %v253 = vpop.permute.xlu0 %252
  %v255 = vmul.f32 %v233, %v253
  %257 = vrot.lane.b32.xlu0 %v255, 32
  %v258 = vpop.permute.xlu0 %257
  %260 = vst.msk [vmem:[#allocation2] sm:$0xf] %vm142, %v258
  %262 = vrot.lane.b32.xlu0 %v249, 96
  %v263 = vpop.permute.xlu0 %262
  %265 = vst.msk [vmem:[#allocation3] sm:$0xf] %vm142, %v263
  %s266 = scalar_lea.vmem %s4, 4
  %267 = vst.msk [vmem:[%s266] sm:$0xf] %vm142, %v258
  %v268 = vld [vmem:[#allocation2] sm:$0xf]
  %v269 = vld [vmem:[#allocation3] sm:$0xf]
  %s270 = scalar_lea.vmem %s0, 8
  %v271 = vld [vmem:[%s270] sm:$0xf]
  %v273 = vsel %vm35, %v268, 0
  %275 = vmatprep.subr.mxu0 0.0
  %276 = vmatpush1.msra.mxu0 %v28
  %277 = vmatprep.subr.mxu0 0.0
  %278 = vmatpush1.msra.mxu0 %v29
  %279 = vmatprep.subr.mxu0 0.0
  %280 = vmatpush1.msra.mxu0 %v30
  %281 = vmatprep.subr.mxu0 0.0
  %282 = vmatpush1.msra.mxu0 %v31
  %283 = vmatprep.subr.mxu0 0.0
  %284 = vmatpush1.msra.mxu0 0.0
  %285 = vmatprep.subr.mxu0 0.0
  %286 = vmatpush1.msra.mxu0 0.0
  %287 = vmatprep.subr.mxu0 0.0
  %288 = vmatpush1.msra.mxu0 0.0
  %289 = vmatprep.subr.mxu0 0.0
  %290 = vmatpush1.msra.mxu0 0.0
  %291 = vmatprep.subr.mxu0 0.0
  %292 = vmatpush1.msra.mxu0 0.0
  %293 = vmatprep.subr.mxu0 0.0
  %294 = vmatpush1.msra.mxu0 0.0
  %295 = vmatprep.subr.mxu0 0.0
  %296 = vmatpush1.msra.mxu0 0.0
  %297 = vmatprep.subr.mxu0 0.0
  %298 = vmatpush1.msra.mxu0 0.0
  %299 = vmatprep.subr.mxu0 0.0
  %300 = vmatpush1.msra.mxu0 0.0
  %301 = vmatprep.subr.mxu0 0.0
  %302 = vmatpush1.msra.mxu0 0.0
  %303 = vmatprep.subr.mxu0 0.0
  %304 = vmatpush1.msra.mxu0 0.0
  %305 = vmatprep.subr.mxu0 0.0
  %306 = vmatpush1.msra.mxu0 0.0
  %307 = vmatprep.subr.mxu0 0.0
  %308 = vmatpush1.msra.mxu0 0.0
  %309 = vmatprep.subr.mxu0 0.0
  %310 = vmatpush1.msra.mxu0 0.0
  %311 = vmatprep.subr.mxu0 0.0
  %312 = vmatpush1.msra.mxu0 0.0
  %313 = vmatprep.subr.mxu0 0.0
  %314 = vmatpush1.msra.mxu0 0.0
  %315 = vmatprep.subr.mxu0 0.0
  %316 = vmatpush1.msra.mxu0 0.0
  %317 = vmatprep.subr.mxu0 0.0
  %318 = vmatpush1.msra.mxu0 0.0
  %319 = vmatprep.subr.mxu0 0.0
  %320 = vmatpush1.msra.mxu0 0.0
  %321 = vmatprep.subr.mxu0 0.0
  %322 = vmatpush1.msra.mxu0 0.0
  %323 = vmatprep.subr.mxu0 0.0
  %324 = vmatpush1.msra.mxu0 0.0
  %325 = vmatprep.subr.mxu0 0.0
  %326 = vmatpush1.msra.mxu0 0.0
  %327 = vmatprep.subr.mxu0 0.0
  %328 = vmatpush1.msra.mxu0 0.0
  %329 = vmatprep.subr.mxu0 0.0
  %330 = vmatpush1.msra.mxu0 0.0
  %331 = vmatprep.subr.mxu0 0.0
  %332 = vmatpush1.msra.mxu0 0.0
  %333 = vmatprep.subr.mxu0 0.0
  %334 = vmatpush1.msra.mxu0 0.0
  %335 = vmatprep.subr.mxu0 0.0
  %336 = vmatpush1.msra.mxu0 0.0
  %337 = vmatprep.subr.mxu0 0.0
  %338 = vmatpush1.msra.mxu0 0.0
  %339 = vmatprep.mubr.f32.mxu0 0.0
  %340 = vmatmul.mubr.f32.gmra.mrb[0].mxu0 %v273
  %v341 = vpop.f32.mrb[0].mxu0
  %v342 = vadd.f32 0.0, %v341
  %v343 = vpop.f32.mrb[0].mxu0
  %344 = vdwg.mxu0
  %v345 = vadd.f32 %v271, %v342
  %v346 = vxor.u32 %v345, 2147483648
  %v347 = vmul.f32 %v346, 1.442695
  %v348 = vpow.pop %v347
  %v349 = vadd.f32 %v348, 1.0
  %v350 = vrcp.pop %v349
  %v351 = vmul.f32 1.0, %v350
  %v352 = vtanh.pop %v345
  %354 = vrot.lane.b32.xlu0 %v269, 32
  %v355 = vpop.permute.xlu0 %354
  %v357 = vmul.f32 %v351, %v355
  %359 = vrot.lane.b32.xlu0 %v352, 64
  %v360 = vpop.permute.xlu0 %359
  %v362 = vmul.f32 %v351, %v360
  %364 = vrot.lane.b32.xlu0 %v362, 32
  %v365 = vpop.permute.xlu0 %364
  %v367 = vadd.f32 %v357, %v365
  %v368 = vtanh.pop %v367
  %370 = vrot.lane.b32.xlu0 %v368, 64
  %v371 = vpop.permute.xlu0 %370
  %v373 = vmul.f32 %v351, %v371
  %375 = vrot.lane.b32.xlu0 %v373, 32
  %v376 = vpop.permute.xlu0 %375
  %378 = vst.msk [vmem:[#allocation2] sm:$0xf] %vm142, %v376
  %380 = vrot.lane.b32.xlu0 %v367, 96
  %v381 = vpop.permute.xlu0 %380
  %383 = vst.msk [vmem:[#allocation3] sm:$0xf] %vm142, %v381
  %s384 = scalar_lea.vmem %s4, 8
  %385 = vst.msk [vmem:[%s384] sm:$0xf] %vm142, %v376
  %v386 = vld [vmem:[#allocation2] sm:$0xf]
  %v387 = vld [vmem:[#allocation3] sm:$0xf]
  %s388 = scalar_lea.vmem %s0, 12
  %v389 = vld [vmem:[%s388] sm:$0xf]
  %v391 = vsel %vm35, %v386, 0
  %393 = vmatprep.subr.mxu0 0.0
  %394 = vmatpush1.msra.mxu0 %v28
  %395 = vmatprep.subr.mxu0 0.0
  %396 = vmatpush1.msra.mxu0 %v29
  %397 = vmatprep.subr.mxu0 0.0
  %398 = vmatpush1.msra.mxu0 %v30
  %399 = vmatprep.subr.mxu0 0.0
  %400 = vmatpush1.msra.mxu0 %v31
  %401 = vmatprep.subr.mxu0 0.0
  %402 = vmatpush1.msra.mxu0 0.0
  %403 = vmatprep.subr.mxu0 0.0
  %404 = vmatpush1.msra.mxu0 0.0
  %405 = vmatprep.subr.mxu0 0.0
  %406 = vmatpush1.msra.mxu0 0.0
  %407 = vmatprep.subr.mxu0 0.0
  %408 = vmatpush1.msra.mxu0 0.0
  %409 = vmatprep.subr.mxu0 0.0
  %410 = vmatpush1.msra.mxu0 0.0
  %411 = vmatprep.subr.mxu0 0.0
  %412 = vmatpush1.msra.mxu0 0.0
  %413 = vmatprep.subr.mxu0 0.0
  %414 = vmatpush1.msra.mxu0 0.0
  %415 = vmatprep.subr.mxu0 0.0
  %416 = vmatpush1.msra.mxu0 0.0
  %417 = vmatprep.subr.mxu0 0.0
  %418 = vmatpush1.msra.mxu0 0.0
  %419 = vmatprep.subr.mxu0 0.0
  %420 = vmatpush1.msra.mxu0 0.0
  %421 = vmatprep.subr.mxu0 0.0
  %422 = vmatpush1.msra.mxu0 0.0
  %423 = vmatprep.subr.mxu0 0.0
  %424 = vmatpush1.msra.mxu0 0.0
  %425 = vmatprep.subr.mxu0 0.0
  %426 = vmatpush1.msra.mxu0 0.0
  %427 = vmatprep.subr.mxu0 0.0
  %428 = vmatpush1.msra.mxu0 0.0
  %429 = vmatprep.subr.mxu0 0.0
  %430 = vmatpush1.msra.mxu0 0.0
  %431 = vmatprep.subr.mxu0 0.0
  %432 = vmatpush1.msra.mxu0 0.0
  %433 = vmatprep.subr.mxu0 0.0
  %434 = vmatpush1.msra.mxu0 0.0
  %435 = vmatprep.subr.mxu0 0.0
  %436 = vmatpush1.msra.mxu0 0.0
  %437 = vmatprep.subr.mxu0 0.0
  %438 = vmatpush1.msra.mxu0 0.0
  %439 = vmatprep.subr.mxu0 0.0
  %440 = vmatpush1.msra.mxu0 0.0
  %441 = vmatprep.subr.mxu0 0.0
  %442 = vmatpush1.msra.mxu0 0.0
  %443 = vmatprep.subr.mxu0 0.0
  %444 = vmatpush1.msra.mxu0 0.0
  %445 = vmatprep.subr.mxu0 0.0
  %446 = vmatpush1.msra.mxu0 0.0
  %447 = vmatprep.subr.mxu0 0.0
  %448 = vmatpush1.msra.mxu0 0.0
  %449 = vmatprep.subr.mxu0 0.0
  %450 = vmatpush1.msra.mxu0 0.0
  %451 = vmatprep.subr.mxu0 0.0
  %452 = vmatpush1.msra.mxu0 0.0
  %453 = vmatprep.subr.mxu0 0.0
  %454 = vmatpush1.msra.mxu0 0.0
  %455 = vmatprep.subr.mxu0 0.0
  %456 = vmatpush1.msra.mxu0 0.0
  %457 = vmatprep.mubr.f32.mxu0 0.0
  %458 = vmatmul.mubr.f32.gmra.mrb[0].mxu0 %v391
  %v459 = vpop.f32.mrb[0].mxu0
  %v460 = vadd.f32 0.0, %v459
  %v461 = vpop.f32.mrb[0].mxu0
  %462 = vdwg.mxu0
  %v463 = vadd.f32 %v389, %v460
  %v464 = vxor.u32 %v463, 2147483648
  %v465 = vmul.f32 %v464, 1.442695
  %v466 = vpow.pop %v465
  %v467 = vadd.f32 %v466, 1.0
  %v468 = vrcp.pop %v467
  %v469 = vmul.f32 1.0, %v468
  %v470 = vtanh.pop %v463
  %472 = vrot.lane.b32.xlu0 %v387, 32
  %v473 = vpop.permute.xlu0 %472
  %v475 = vmul.f32 %v469, %v473
  %477 = vrot.lane.b32.xlu0 %v470, 64
  %v478 = vpop.permute.xlu0 %477
  %v480 = vmul.f32 %v469, %v478
  %482 = vrot.lane.b32.xlu0 %v480, 32
  %v483 = vpop.permute.xlu0 %482
  %v485 = vadd.f32 %v475, %v483
  %v486 = vtanh.pop %v485
  %488 = vrot.lane.b32.xlu0 %v486, 64
  %v489 = vpop.permute.xlu0 %488
  %v491 = vmul.f32 %v469, %v489
  %493 = vrot.lane.b32.xlu0 %v491, 32
  %v494 = vpop.permute.xlu0 %493
  %496 = vst.msk [vmem:[#allocation2] sm:$0xf] %vm142, %v494
  %498 = vrot.lane.b32.xlu0 %v485, 96
  %v499 = vpop.permute.xlu0 %498
  %501 = vst.msk [vmem:[#allocation3] sm:$0xf] %vm142, %v499
  %s502 = scalar_lea.vmem %s4, 12
  %503 = vst.msk [vmem:[%s502] sm:$0xf] %vm142, %v494
  %v504 = vld [vmem:[#allocation2] sm:$0xf]
  %v505 = vld [vmem:[#allocation3] sm:$0xf]
  %s506 = scalar_lea.vmem %s0, 16
  %v507 = vld [vmem:[%s506] sm:$0xf]
  %v509 = vsel %vm35, %v504, 0
  %511 = vmatprep.subr.mxu0 0.0
  %512 = vmatpush1.msra.mxu0 %v28
  %513 = vmatprep.subr.mxu0 0.0
  %514 = vmatpush1.msra.mxu0 %v29
  %515 = vmatprep.subr.mxu0 0.0
  %516 = vmatpush1.msra.mxu0 %v30
  %517 = vmatprep.subr.mxu0 0.0
  %518 = vmatpush1.msra.mxu0 %v31
  %519 = vmatprep.subr.mxu0 0.0
  %520 = vmatpush1.msra.mxu0 0.0
  %521 = vmatprep.subr.mxu0 0.0
  %522 = vmatpush1.msra.mxu0 0.0
  %523 = vmatprep.subr.mxu0 0.0
  %524 = vmatpush1.msra.mxu0 0.0
  %525 = vmatprep.subr.mxu0 0.0
  %526 = vmatpush1.msra.mxu0 0.0
  %527 = vmatprep.subr.mxu0 0.0
  %528 = vmatpush1.msra.mxu0 0.0
  %529 = vmatprep.subr.mxu0 0.0
  %530 = vmatpush1.msra.mxu0 0.0
  %531 = vmatprep.subr.mxu0 0.0
  %532 = vmatpush1.msra.mxu0 0.0
  %533 = vmatprep.subr.mxu0 0.0
  %534 = vmatpush1.msra.mxu0 0.0
  %535 = vmatprep.subr.mxu0 0.0
  %536 = vmatpush1.msra.mxu0 0.0
  %537 = vmatprep.subr.mxu0 0.0
  %538 = vmatpush1.msra.mxu0 0.0
  %539 = vmatprep.subr.mxu0 0.0
  %540 = vmatpush1.msra.mxu0 0.0
  %541 = vmatprep.subr.mxu0 0.0
  %542 = vmatpush1.msra.mxu0 0.0
  %543 = vmatprep.subr.mxu0 0.0
  %544 = vmatpush1.msra.mxu0 0.0
  %545 = vmatprep.subr.mxu0 0.0
  %546 = vmatpush1.msra.mxu0 0.0
  %547 = vmatprep.subr.mxu0 0.0
  %548 = vmatpush1.msra.mxu0 0.0
  %549 = vmatprep.subr.mxu0 0.0
  %550 = vmatpush1.msra.mxu0 0.0
  %551 = vmatprep.subr.mxu0 0.0
  %552 = vmatpush1.msra.mxu0 0.0
  %553 = vmatprep.subr.mxu0 0.0
  %554 = vmatpush1.msra.mxu0 0.0
  %555 = vmatprep.subr.mxu0 0.0
  %556 = vmatpush1.msra.mxu0 0.0
  %557 = vmatprep.subr.mxu0 0.0
  %558 = vmatpush1.msra.mxu0 0.0
  %559 = vmatprep.subr.mxu0 0.0
  %560 = vmatpush1.msra.mxu0 0.0
  %561 = vmatprep.subr.mxu0 0.0
  %562 = vmatpush1.msra.mxu0 0.0
  %563 = vmatprep.subr.mxu0 0.0
  %564 = vmatpush1.msra.mxu0 0.0
  %565 = vmatprep.subr.mxu0 0.0
  %566 = vmatpush1.msra.mxu0 0.0
  %567 = vmatprep.subr.mxu0 0.0
  %568 = vmatpush1.msra.mxu0 0.0
  %569 = vmatprep.subr.mxu0 0.0
  %570 = vmatpush1.msra.mxu0 0.0
  %571 = vmatprep.subr.mxu0 0.0
  %572 = vmatpush1.msra.mxu0 0.0
  %573 = vmatprep.subr.mxu0 0.0
  %574 = vmatpush1.msra.mxu0 0.0
  %575 = vmatprep.mubr.f32.mxu0 0.0
  %576 = vmatmul.mubr.f32.gmra.mrb[0].mxu0 %v509
  %v577 = vpop.f32.mrb[0].mxu0
  %v578 = vadd.f32 0.0, %v577
  %v579 = vpop.f32.mrb[0].mxu0
  %580 = vdwg.mxu0
  %v581 = vadd.f32 %v507, %v578
  %v582 = vxor.u32 %v581, 2147483648
  %v583 = vmul.f32 %v582, 1.442695
  %v584 = vpow.pop %v583
  %v585 = vadd.f32 %v584, 1.0
  %v586 = vrcp.pop %v585
  %v587 = vmul.f32 1.0, %v586
  %v588 = vtanh.pop %v581
  %590 = vrot.lane.b32.xlu0 %v505, 32
  %v591 = vpop.permute.xlu0 %590
  %v593 = vmul.f32 %v587, %v591
  %595 = vrot.lane.b32.xlu0 %v588, 64
  %v596 = vpop.permute.xlu0 %595
  %v598 = vmul.f32 %v587, %v596
  %600 = vrot.lane.b32.xlu0 %v598, 32
  %v601 = vpop.permute.xlu0 %600
  %v603 = vadd.f32 %v593, %v601
  %v604 = vtanh.pop %v603
  %606 = vrot.lane.b32.xlu0 %v604, 64
  %v607 = vpop.permute.xlu0 %606
  %v609 = vmul.f32 %v587, %v607
  %611 = vrot.lane.b32.xlu0 %v609, 32
  %v612 = vpop.permute.xlu0 %611
  %614 = vst.msk [vmem:[#allocation2] sm:$0xf] %vm142, %v612
  %616 = vrot.lane.b32.xlu0 %v603, 96
  %v617 = vpop.permute.xlu0 %616
  %619 = vst.msk [vmem:[#allocation3] sm:$0xf] %vm142, %v617
  %s620 = scalar_lea.vmem %s4, 16
  %621 = vst.msk [vmem:[%s620] sm:$0xf] %vm142, %v612
  %v622 = vld [vmem:[#allocation2] sm:$0xf]
  %v623 = vld [vmem:[#allocation3] sm:$0xf]
  %s624 = scalar_lea.vmem %s0, 20
  %v625 = vld [vmem:[%s624] sm:$0xf]
  %v627 = vsel %vm35, %v622, 0
  %629 = vmatprep.subr.mxu0 0.0
  %630 = vmatpush1.msra.mxu0 %v28
  %631 = vmatprep.subr.mxu0 0.0
  %632 = vmatpush1.msra.mxu0 %v29
  %633 = vmatprep.subr.mxu0 0.0
  %634 = vmatpush1.msra.mxu0 %v30
  %635 = vmatprep.subr.mxu0 0.0
  %636 = vmatpush1.msra.mxu0 %v31
  %637 = vmatprep.subr.mxu0 0.0
  %638 = vmatpush1.msra.mxu0 0.0
  %639 = vmatprep.subr.mxu0 0.0
  %640 = vmatpush1.msra.mxu0 0.0
  %641 = vmatprep.subr.mxu0 0.0
  %642 = vmatpush1.msra.mxu0 0.0
  %643 = vmatprep.subr.mxu0 0.0
  %644 = vmatpush1.msra.mxu0 0.0
  %645 = vmatprep.subr.mxu0 0.0
  %646 = vmatpush1.msra.mxu0 0.0
  %647 = vmatprep.subr.mxu0 0.0
  %648 = vmatpush1.msra.mxu0 0.0
  %649 = vmatprep.subr.mxu0 0.0
  %650 = vmatpush1.msra.mxu0 0.0
  %651 = vmatprep.subr.mxu0 0.0
  %652 = vmatpush1.msra.mxu0 0.0
  %653 = vmatprep.subr.mxu0 0.0
  %654 = vmatpush1.msra.mxu0 0.0
  %655 = vmatprep.subr.mxu0 0.0
  %656 = vmatpush1.msra.mxu0 0.0
  %657 = vmatprep.subr.mxu0 0.0
  %658 = vmatpush1.msra.mxu0 0.0
  %659 = vmatprep.subr.mxu0 0.0
  %660 = vmatpush1.msra.mxu0 0.0
  %661 = vmatprep.subr.mxu0 0.0
  %662 = vmatpush1.msra.mxu0 0.0
  %663 = vmatprep.subr.mxu0 0.0
  %664 = vmatpush1.msra.mxu0 0.0
  %665 = vmatprep.subr.mxu0 0.0
  %666 = vmatpush1.msra.mxu0 0.0
  %667 = vmatprep.subr.mxu0 0.0
  %668 = vmatpush1.msra.mxu0 0.0
  %669 = vmatprep.subr.mxu0 0.0
  %670 = vmatpush1.msra.mxu0 0.0
  %671 = vmatprep.subr.mxu0 0.0
  %672 = vmatpush1.msra.mxu0 0.0
  %673 = vmatprep.subr.mxu0 0.0
  %674 = vmatpush1.msra.mxu0 0.0
  %675 = vmatprep.subr.mxu0 0.0
  %676 = vmatpush1.msra.mxu0 0.0
  %677 = vmatprep.subr.mxu0 0.0
  %678 = vmatpush1.msra.mxu0 0.0
  %679 = vmatprep.subr.mxu0 0.0
  %680 = vmatpush1.msra.mxu0 0.0
  %681 = vmatprep.subr.mxu0 0.0
  %682 = vmatpush1.msra.mxu0 0.0
  %683 = vmatprep.subr.mxu0 0.0
  %684 = vmatpush1.msra.mxu0 0.0
  %685 = vmatprep.subr.mxu0 0.0
  %686 = vmatpush1.msra.mxu0 0.0
  %687 = vmatprep.subr.mxu0 0.0
  %688 = vmatpush1.msra.mxu0 0.0
  %689 = vmatprep.subr.mxu0 0.0
  %690 = vmatpush1.msra.mxu0 0.0
  %691 = vmatprep.subr.mxu0 0.0
  %692 = vmatpush1.msra.mxu0 0.0
  %693 = vmatprep.mubr.f32.mxu0 0.0
  %694 = vmatmul.mubr.f32.gmra.mrb[0].mxu0 %v627
  %v695 = vpop.f32.mrb[0].mxu0
  %v696 = vadd.f32 0.0, %v695
  %v697 = vpop.f32.mrb[0].mxu0
  %698 = vdwg.mxu0
  %v699 = vadd.f32 %v625, %v696
  %v700 = vxor.u32 %v699, 2147483648
  %v701 = vmul.f32 %v700, 1.442695
  %v702 = vpow.pop %v701
  %v703 = vadd.f32 %v702, 1.0
  %v704 = vrcp.pop %v703
  %v705 = vmul.f32 1.0, %v704
  %v706 = vtanh.pop %v699
  %708 = vrot.lane.b32.xlu0 %v623, 32
  %v709 = vpop.permute.xlu0 %708
  %v711 = vmul.f32 %v705, %v709
  %713 = vrot.lane.b32.xlu0 %v706, 64
  %v714 = vpop.permute.xlu0 %713
  %v716 = vmul.f32 %v705, %v714
  %718 = vrot.lane.b32.xlu0 %v716, 32
  %v719 = vpop.permute.xlu0 %718
  %v721 = vadd.f32 %v711, %v719
  %v722 = vtanh.pop %v721
  %724 = vrot.lane.b32.xlu0 %v722, 64
  %v725 = vpop.permute.xlu0 %724
  %v727 = vmul.f32 %v705, %v725
  %729 = vrot.lane.b32.xlu0 %v727, 32
  %v730 = vpop.permute.xlu0 %729
  %732 = vst.msk [vmem:[#allocation2] sm:$0xf] %vm142, %v730
  %734 = vrot.lane.b32.xlu0 %v721, 96
  %v735 = vpop.permute.xlu0 %734
  %737 = vst.msk [vmem:[#allocation3] sm:$0xf] %vm142, %v735
  %s738 = scalar_lea.vmem %s4, 20
  %739 = vst.msk [vmem:[%s738] sm:$0xf] %vm142, %v730
  %v740 = vld [vmem:[#allocation2] sm:$0xf]
  %v741 = vld [vmem:[#allocation3] sm:$0xf]
  %s742 = scalar_lea.vmem %s0, 24
  %v743 = vld [vmem:[%s742] sm:$0xf]
  %v745 = vsel %vm35, %v740, 0
  %747 = vmatprep.subr.mxu0 0.0
  %748 = vmatpush1.msra.mxu0 %v28
  %749 = vmatprep.subr.mxu0 0.0
  %750 = vmatpush1.msra.mxu0 %v29
  %751 = vmatprep.subr.mxu0 0.0
  %752 = vmatpush1.msra.mxu0 %v30
  %753 = vmatprep.subr.mxu0 0.0
  %754 = vmatpush1.msra.mxu0 %v31
  %755 = vmatprep.subr.mxu0 0.0
  %756 = vmatpush1.msra.mxu0 0.0
  %757 = vmatprep.subr.mxu0 0.0
  %758 = vmatpush1.msra.mxu0 0.0
  %759 = vmatprep.subr.mxu0 0.0
  %760 = vmatpush1.msra.mxu0 0.0
  %761 = vmatprep.subr.mxu0 0.0
  %762 = vmatpush1.msra.mxu0 0.0
  %763 = vmatprep.subr.mxu0 0.0
  %764 = vmatpush1.msra.mxu0 0.0
  %765 = vmatprep.subr.mxu0 0.0
  %766 = vmatpush1.msra.mxu0 0.0
  %767 = vmatprep.subr.mxu0 0.0
  %768 = vmatpush1.msra.mxu0 0.0
  %769 = vmatprep.subr.mxu0 0.0
  %770 = vmatpush1.msra.mxu0 0.0
  %771 = vmatprep.subr.mxu0 0.0
  %772 = vmatpush1.msra.mxu0 0.0
  %773 = vmatprep.subr.mxu0 0.0
  %774 = vmatpush1.msra.mxu0 0.0
  %775 = vmatprep.subr.mxu0 0.0
  %776 = vmatpush1.msra.mxu0 0.0
  %777 = vmatprep.subr.mxu0 0.0
  %778 = vmatpush1.msra.mxu0 0.0
  %779 = vmatprep.subr.mxu0 0.0
  %780 = vmatpush1.msra.mxu0 0.0
  %781 = vmatprep.subr.mxu0 0.0
  %782 = vmatpush1.msra.mxu0 0.0
  %783 = vmatprep.subr.mxu0 0.0
  %784 = vmatpush1.msra.mxu0 0.0
  %785 = vmatprep.subr.mxu0 0.0
  %786 = vmatpush1.msra.mxu0 0.0
  %787 = vmatprep.subr.mxu0 0.0
  %788 = vmatpush1.msra.mxu0 0.0
  %789 = vmatprep.subr.mxu0 0.0
  %790 = vmatpush1.msra.mxu0 0.0
  %791 = vmatprep.subr.mxu0 0.0
  %792 = vmatpush1.msra.mxu0 0.0
  %793 = vmatprep.subr.mxu0 0.0
  %794 = vmatpush1.msra.mxu0 0.0
  %795 = vmatprep.subr.mxu0 0.0
  %796 = vmatpush1.msra.mxu0 0.0
  %797 = vmatprep.subr.mxu0 0.0
  %798 = vmatpush1.msra.mxu0 0.0
  %799 = vmatprep.subr.mxu0 0.0
  %800 = vmatpush1.msra.mxu0 0.0
  %801 = vmatprep.subr.mxu0 0.0
  %802 = vmatpush1.msra.mxu0 0.0
  %803 = vmatprep.subr.mxu0 0.0
  %804 = vmatpush1.msra.mxu0 0.0
  %805 = vmatprep.subr.mxu0 0.0
  %806 = vmatpush1.msra.mxu0 0.0
  %807 = vmatprep.subr.mxu0 0.0
  %808 = vmatpush1.msra.mxu0 0.0
  %809 = vmatprep.subr.mxu0 0.0
  %810 = vmatpush1.msra.mxu0 0.0
  %811 = vmatprep.mubr.f32.mxu0 0.0
  %812 = vmatmul.mubr.f32.gmra.mrb[0].mxu0 %v745
  %v813 = vpop.f32.mrb[0].mxu0
  %v814 = vadd.f32 0.0, %v813
  %v815 = vpop.f32.mrb[0].mxu0
  %816 = vdwg.mxu0
  %v817 = vadd.f32 %v743, %v814
  %v818 = vxor.u32 %v817, 2147483648
  %v819 = vmul.f32 %v818, 1.442695
  %v820 = vpow.pop %v819
  %v821 = vadd.f32 %v820, 1.0
  %v822 = vrcp.pop %v821
  %v823 = vmul.f32 1.0, %v822
  %v824 = vtanh.pop %v817
  %826 = vrot.lane.b32.xlu0 %v741, 32
  %v827 = vpop.permute.xlu0 %826
  %v829 = vmul.f32 %v823, %v827
  %831 = vrot.lane.b32.xlu0 %v824, 64
  %v832 = vpop.permute.xlu0 %831
  %v834 = vmul.f32 %v823, %v832
  %836 = vrot.lane.b32.xlu0 %v834, 32
  %v837 = vpop.permute.xlu0 %836
  %v839 = vadd.f32 %v829, %v837
  %v840 = vtanh.pop %v839
  %842 = vrot.lane.b32.xlu0 %v840, 64
  %v843 = vpop.permute.xlu0 %842
  %v845 = vmul.f32 %v823, %v843
  %847 = vrot.lane.b32.xlu0 %v845, 32
  %v848 = vpop.permute.xlu0 %847
  %850 = vst.msk [vmem:[#allocation2] sm:$0xf] %vm142, %v848
  %852 = vrot.lane.b32.xlu0 %v839, 96
  %v853 = vpop.permute.xlu0 %852
  %855 = vst.msk [vmem:[#allocation3] sm:$0xf] %vm142, %v853
  %s856 = scalar_lea.vmem %s4, 24
  %857 = vst.msk [vmem:[%s856] sm:$0xf] %vm142, %v848
  %v858 = vld [vmem:[#allocation2] sm:$0xf]
  %v859 = vld [vmem:[#allocation3] sm:$0xf]
  %s860 = scalar_lea.vmem %s0, 28
  %v861 = vld [vmem:[%s860] sm:$0xf]
  %v863 = vsel %vm35, %v858, 0
  %865 = vmatprep.subr.mxu0 0.0
  %866 = vmatpush1.msra.mxu0 %v28
  %867 = vmatprep.subr.mxu0 0.0
  %868 = vmatpush1.msra.mxu0 %v29
  %869 = vmatprep.subr.mxu0 0.0
  %870 = vmatpush1.msra.mxu0 %v30
  %871 = vmatprep.subr.mxu0 0.0
  %872 = vmatpush1.msra.mxu0 %v31
  %873 = vmatprep.subr.mxu0 0.0
  %874 = vmatpush1.msra.mxu0 0.0
  %875 = vmatprep.subr.mxu0 0.0
  %876 = vmatpush1.msra.mxu0 0.0
  %877 = vmatprep.subr.mxu0 0.0
  %878 = vmatpush1.msra.mxu0 0.0
  %879 = vmatprep.subr.mxu0 0.0
  %880 = vmatpush1.msra.mxu0 0.0
  %881 = vmatprep.subr.mxu0 0.0
  %882 = vmatpush1.msra.mxu0 0.0
  %883 = vmatprep.subr.mxu0 0.0
  %884 = vmatpush1.msra.mxu0 0.0
  %885 = vmatprep.subr.mxu0 0.0
  %886 = vmatpush1.msra.mxu0 0.0
  %887 = vmatprep.subr.mxu0 0.0
  %888 = vmatpush1.msra.mxu0 0.0
  %889 = vmatprep.subr.mxu0 0.0
  %890 = vmatpush1.msra.mxu0 0.0
  %891 = vmatprep.subr.mxu0 0.0
  %892 = vmatpush1.msra.mxu0 0.0
  %893 = vmatprep.subr.mxu0 0.0
  %894 = vmatpush1.msra.mxu0 0.0
  %895 = vmatprep.subr.mxu0 0.0
  %896 = vmatpush1.msra.mxu0 0.0
  %897 = vmatprep.subr.mxu0 0.0
  %898 = vmatpush1.msra.mxu0 0.0
  %899 = vmatprep.subr.mxu0 0.0
  %900 = vmatpush1.msra.mxu0 0.0
  %901 = vmatprep.subr.mxu0 0.0
  %902 = vmatpush1.msra.mxu0 0.0
  %903 = vmatprep.subr.mxu0 0.0
  %904 = vmatpush1.msra.mxu0 0.0
  %905 = vmatprep.subr.mxu0 0.0
  %906 = vmatpush1.msra.mxu0 0.0
  %907 = vmatprep.subr.mxu0 0.0
  %908 = vmatpush1.msra.mxu0 0.0
  %909 = vmatprep.subr.mxu0 0.0
  %910 = vmatpush1.msra.mxu0 0.0
  %911 = vmatprep.subr.mxu0 0.0
  %912 = vmatpush1.msra.mxu0 0.0
  %913 = vmatprep.subr.mxu0 0.0
  %914 = vmatpush1.msra.mxu0 0.0
  %915 = vmatprep.subr.mxu0 0.0
  %916 = vmatpush1.msra.mxu0 0.0
  %917 = vmatprep.subr.mxu0 0.0
  %918 = vmatpush1.msra.mxu0 0.0
  %919 = vmatprep.subr.mxu0 0.0
  %920 = vmatpush1.msra.mxu0 0.0
  %921 = vmatprep.subr.mxu0 0.0
  %922 = vmatpush1.msra.mxu0 0.0
  %923 = vmatprep.subr.mxu0 0.0
  %924 = vmatpush1.msra.mxu0 0.0
  %925 = vmatprep.subr.mxu0 0.0
  %926 = vmatpush1.msra.mxu0 0.0
  %927 = vmatprep.subr.mxu0 0.0
  %928 = vmatpush1.msra.mxu0 0.0
  %929 = vmatprep.mubr.f32.mxu0 0.0
  %930 = vmatmul.mubr.f32.gmra.mrb[0].mxu0 %v863
  %v931 = vpop.f32.mrb[0].mxu0
  %v932 = vadd.f32 0.0, %v931
  %v933 = vpop.f32.mrb[0].mxu0
  %934 = vdwg.mxu0
  %v935 = vadd.f32 %v861, %v932
  %v936 = vxor.u32 %v935, 2147483648
  %v937 = vmul.f32 %v936, 1.442695
  %v938 = vpow.pop %v937
  %v939 = vadd.f32 %v938, 1.0
  %v940 = vrcp.pop %v939
  %v941 = vmul.f32 1.0, %v940
  %v942 = vtanh.pop %v935
  %944 = vrot.lane.b32.xlu0 %v859, 32
  %v945 = vpop.permute.xlu0 %944
  %v947 = vmul.f32 %v941, %v945
  %949 = vrot.lane.b32.xlu0 %v942, 64
  %v950 = vpop.permute.xlu0 %949
  %v952 = vmul.f32 %v941, %v950
  %954 = vrot.lane.b32.xlu0 %v952, 32
  %v955 = vpop.permute.xlu0 %954
  %v957 = vadd.f32 %v947, %v955
  %v958 = vtanh.pop %v957
  %960 = vrot.lane.b32.xlu0 %v958, 64
  %v961 = vpop.permute.xlu0 %960
  %v963 = vmul.f32 %v941, %v961
  %965 = vrot.lane.b32.xlu0 %v963, 32
  %v966 = vpop.permute.xlu0 %965
  %968 = vst.msk [vmem:[#allocation2] sm:$0xf] %vm142, %v966
  %970 = vrot.lane.b32.xlu0 %v957, 96
  %v971 = vpop.permute.xlu0 %970
  %973 = vst.msk [vmem:[#allocation3] sm:$0xf] %vm142, %v971
  %s974 = scalar_lea.vmem %s4, 28
  %975 = vst.msk [vmem:[%s974] sm:$0xf] %vm142, %v966
  %v976 = vld [vmem:[#allocation3] sm:$0xf]
  %977 = vst.msk [vmem:[%s5] sm:$0xf] %vm142, %v976
  // Predicated region
  $region22: #{torch_lstm_forward.6} parent=0 // pred_check
    _
  $region23: #{torch_lstm_forward.6} parent=0 // pred_check_branch
    %979 = sbr.rel (0) target = $region25
  $region24: #{torch_lstm_forward.6} parent=0 // pred_region
    _
  $region25: #{torch_lstm_forward.6} parent=0 // pred_fallthru
    _
  // Predicated region
  $region26: #{torch_lstm_forward.6} parent=0 // pred_check
    _
  $region27: #{torch_lstm_forward.6} parent=0 // pred_check_branch
    %981 = sbr.rel (0) target = $region29
  $region28: #{torch_lstm_forward.6} parent=0 // pred_region
    _
  $region29: #{torch_lstm_forward.6} parent=0 // pred_fallthru
    _
  // Predicated region
  $region30: #{torch_lstm_forward.6} parent=0 // pred_check
    _
  $region31: #{torch_lstm_forward.6} parent=0 // pred_check_branch
    %983 = sbr.rel (0) target = $region33
  $region32: #{torch_lstm_forward.6} parent=0 // pred_region
    _
  $region33: #{torch_lstm_forward.6} parent=0 // pred_fallthru
    _
  // Predicated region
  $region34: #{torch_lstm_forward.6} parent=0 // pred_check
    _
  $region35: #{torch_lstm_forward.6} parent=0 // pred_check_branch
    %985 = sbr.rel (0) target = $region37
  $region36: #{torch_lstm_forward.6} parent=0 // pred_region
    _
  $region37: #{torch_lstm_forward.6} parent=0 // pred_fallthru
    _

</llo_original>
